<compile_context>
chip_gen: v6e
topology: v6e:2x2x1
jax: 0.10.0
libtpu: 0.0.40
codegen_flags: <defaults>
</compile_context>

<pallas_src>
import math
import numpy as np
import jax
import jax.numpy as jnp
from jax.experimental import pallas as pl
from jax.experimental.pallas import tpu as pltpu


# ----------------------------------------------------------------------------
# Positional encoding (exact port of positionalencoding2d)
# ----------------------------------------------------------------------------
def positionalencoding2d(d_model, height, width):
    if d_model % 4 != 0:
        raise ValueError(
            "Cannot use sin/cos positional encoding with odd dimension "
            "(got dim={:d})".format(d_model))
    pe = jnp.zeros((d_model, height, width), jnp.float32)
    half = d_model // 2
    div_term = jnp.exp(
        jnp.arange(0.0, half, 2, dtype=jnp.float32) * -(math.log(10000.0) / half))
    pos_w = jnp.arange(0.0, width, dtype=jnp.float32)[:, None]
    pos_h = jnp.arange(0.0, height, dtype=jnp.float32)[:, None]
    sin_w = jnp.sin(pos_w * div_term).T      # [half//2, W]
    cos_w = jnp.cos(pos_w * div_term).T
    sin_h = jnp.sin(pos_h * div_term).T      # [half//2, H]
    cos_h = jnp.cos(pos_h * div_term).T
    n = sin_w.shape[0]
    pe = pe.at[0:half:2, :, :].set(jnp.broadcast_to(sin_w[:, None, :], (n, height, width)))
    pe = pe.at[1:half:2, :, :].set(jnp.broadcast_to(cos_w[:, None, :], (n, height, width)))
    pe = pe.at[half::2, :, :].set(jnp.broadcast_to(sin_h[:, :, None], (n, height, width)))
    pe = pe.at[half + 1::2, :, :].set(jnp.broadcast_to(cos_h[:, :, None], (n, height, width)))
    return pe


# ----------------------------------------------------------------------------
# Fused Pallas kernel: W1ᵀ@x -> per-sample agent max -> W2ᵀ@acc + pe_head
# ----------------------------------------------------------------------------
def _fused_kernel(cnt_ref, off_ref,                       # scalar-prefetch (SMEM)
                  x_ref, w1t_ref, w2t_ref, peh_ref,
                  o_ref, acc_ref):
    b = pl.program_id(0)          # sample
    ag = pl.program_id(2)         # agent slot (reduction axis, last)
    n_ag = pl.num_programs(2)
    cnt = cnt_ref[b]

    # First agent always exists (record_len >= 1): direct write, no -inf fill
    # and no extra maximum.
    @pl.when(ag == 0)
    def _():
        acc_ref[...] = jnp.dot(w1t_ref[...], x_ref[0],
                               preferred_element_type=jnp.float32)      # [c_mid, tile]

    @pl.when(jnp.logical_and(ag > 0, ag < cnt))
    def _():
        f = jnp.dot(w1t_ref[...], x_ref[0],
                    preferred_element_type=jnp.float32)                 # [c_mid, tile]
        acc_ref[...] = jnp.maximum(acc_ref[...], f)

    # Finalize: head matmul on the VMEM-resident fused feature; positional
    # encoding + both biases arrive pre-folded in pe_head.
    @pl.when(ag == n_ag - 1)
    def _():
        o_ref[0] = (jnp.dot(w2t_ref[...], acc_ref[...],
                            preferred_element_type=jnp.float32)
                    + peh_ref[...])                                     # [c_head_pad, tile]


def _round_up(x, m):
    return ((x + m - 1) // m) * m


def _pick_tile(n_pix, n_samples, preferred=4096):
    # Big, 128-multiple pixel tiles: the per-step working set is tiny (few MiB
    # even at 4096), so the binding cost is grid-step overhead, not VMEM.
    n_pix_128 = _round_up(n_pix, 128)
    tile = min(preferred, n_pix_128)
    # Give the second TensorCore (v7x megacore) at least one (b, t) block.
    if n_samples == 1 and n_pix_128 >= 256 and n_pix_128 // tile < 2:
        tile = _round_up(max(128, n_pix_128 // 2), 128)
    return tile


def fused_conv_max_heads(x_ncp, w1t, w2t_pad, pe_head_pad,
                         counts, offsets, max_agents, tile):
    """
    x_ncp       : [N_agents, cin, n_pix_pad] float32  (native NCHW, flattened pixels)
    w1t         : [c_mid, cin]
    w2t_pad     : [c_head_pad, c_mid]        (head channels zero-padded to 8-multiple)
    pe_head_pad : [c_head_pad, n_pix_pad]    (= W2ᵀ(W1ᵀ·pe + b1) + b2)
    counts      : int32 [B]   agents per sample
    offsets     : int32 [B]   start agent index per sample
    returns     : [B, c_head_pad, n_pix_pad]
    """
    N, cin, n_pix_pad = x_ncp.shape
    c_mid = w1t.shape[0]
    c_head_pad = w2t_pad.shape[0]
    B = counts.shape[0]
    n_tiles = n_pix_pad // tile

    return pl.pallas_call(
        _fused_kernel,
        out_shape=jax.ShapeDtypeStruct((B, c_head_pad, n_pix_pad), jnp.float32),
        grid_spec=pltpu.PrefetchScalarGridSpec(
            num_scalar_prefetch=2,
            grid=(B, n_tiles, max_agents),
            in_specs=[
                # agent feature tile: agent row chosen from SMEM offsets/counts
                pl.BlockSpec(
                    (1, cin, tile),
                    lambda b, t, ag, cnt, off:
                        (off[b] + jnp.minimum(ag, cnt[b] - 1), 0, t)),
                # resident weights
                pl.BlockSpec((c_mid, cin), lambda b, t, ag, cnt, off: (0, 0)),
                pl.BlockSpec((c_head_pad, c_mid), lambda b, t, ag, cnt, off: (0, 0)),
                # folded positional-encoding-through-heads, indexed by pixel tile
                pl.BlockSpec((c_head_pad, tile), lambda b, t, ag, cnt, off: (0, t)),
            ],
            out_specs=pl.BlockSpec((1, c_head_pad, tile),
                                   lambda b, t, ag, cnt, off: (b, 0, t)),
            scratch_shapes=[pltpu.VMEM((c_mid, tile), jnp.float32)],
        ),
        compiler_params=pltpu.CompilerParams(
            dimension_semantics=("parallel", "parallel", "arbitrary")),
    )(counts, offsets, x_ncp, w1t, w2t_pad, pe_head_pad)


# ----------------------------------------------------------------------------
# Forward pass
# ----------------------------------------------------------------------------
def heter_pyramid_collab_vfe33_forward(feature, record_len, params):
    """
    feature    : [N_agents, 8, H, W] float32 (NCHW; output of per-modality encoder)
    record_len : static python list of ints, sum == N_agents, all >= 1
    params     : dict of deterministic weights
    """
    N, cin, H, W = feature.shape
    c_mid = params["avg_conv_w"].shape[1]
    a = params["anchor_number"]
    nb = params["num_bins"]
    c_head = a + 7 * a + nb * a
    c_head_pad = _round_up(c_head, 8)        # sublane padding only (20 -> 24)

    assert min(record_len) >= 1, "every sample must contain at least one agent"
    B = len(record_len)
    max_agents = int(max(record_len))
    counts = jnp.asarray(record_len, jnp.int32)
    offsets = jnp.asarray(np.concatenate([[0], np.cumsum(record_len)[:-1]]), jnp.int32)

    n_pix = H * W
    tile = _pick_tile(n_pix, B)
    n_pix_pad = _round_up(n_pix, tile)

    # Channels-on-sublanes / pixels-on-lanes: native NCHW is just a reshape.
    x_ncp = feature.reshape(N, cin, n_pix)
    if n_pix_pad != n_pix:
        x_ncp = jnp.pad(x_ncp, ((0, 0), (0, 0), (0, n_pix_pad - n_pix)))

    # Transposed weights; head channels zero-padded to a multiple of 8 sublanes.
    w1t = params["avg_conv_w"].T                                        # [c_mid, cin]
    head_w = jnp.concatenate([params["cls_w"], params["reg_w"], params["dir_w"]], axis=1)
    head_b = jnp.concatenate([params["cls_b"], params["reg_b"], params["dir_b"]], axis=1)
    w2t = jnp.pad(head_w.T, ((0, c_head_pad - c_head), (0, 0)))         # [c_head_pad, c_mid]
    b2 = jnp.pad(head_b[0], (0, c_head_pad - c_head))[:, None]          # [c_head_pad, 1]
    b1 = params["avg_conv_b"][0][:, None]                               # [c_mid, 1]

    # Fold positional encoding + both biases through the linear layers:
    #   max_a((x_a+pe)@W1+b1) @ W2 + b2 == W2ᵀ @ max_a(W1ᵀ x_a) + (W2ᵀ(W1ᵀ pe + b1) + b2)
    pe = positionalencoding2d(cin, H, W).reshape(cin, n_pix)            # [cin, n_pix]
    pe_f = jnp.dot(w1t, pe, precision=jax.lax.Precision.HIGHEST) + b1   # [c_mid, n_pix]
    pe_head = jnp.dot(w2t, pe_f, precision=jax.lax.Precision.HIGHEST) + b2
    if n_pix_pad != n_pix:
        pe_head = jnp.pad(pe_head, ((0, 0), (0, n_pix_pad - n_pix)))

    out = fused_conv_max_heads(x_ncp, w1t, w2t, pe_head,
                               counts, offsets, max_agents, tile)       # [B, c_head_pad, n_pix_pad]

    # Already NCHW: just slice off the padded head channels / pixels and reshape.
    heads = out[:, :c_head, :n_pix].reshape(B, c_head, H, W)
    cls_preds = heads[:, :a]
    reg_preds = heads[:, a:8 * a]
    dir_preds = heads[:, 8 * a:8 * a + nb * a]

    return {
        "pyramid": "collab",
        "cls_preds": cls_preds,
        "reg_preds": reg_preds,
        "dir_preds": dir_preds,
        "occ_single_list": None,  # TODO(synk): produced inside PyramidFusion (external)
    }


# ----------------------------------------------------------------------------
# Pure-JAX reference (un-folded formulation, for correctness check)
# ----------------------------------------------------------------------------
def _reference(feature, record_len, params):
    N, cin, H, W = feature.shape
    a = params["anchor_number"]; nb = params["num_bins"]
    pe = positionalencoding2d(cin, H, W)
    x = jnp.transpose(feature, (0, 2, 3, 1)) + jnp.transpose(pe, (1, 2, 0))[None]
    f = jnp.einsum("nhwc,cd->nhwd", x, params["avg_conv_w"],
                   precision=jax.lax.Precision.HIGHEST) + params["avg_conv_b"][0]
    fused, start = [], 0
    for rl in record_len:
        fused.append(jnp.max(f[start:start + rl], axis=0))
        start += rl
    fused = jnp.stack(fused)
    hw = jnp.concatenate([params["cls_w"], params["reg_w"], params["dir_w"]], axis=1)
    hb = jnp.concatenate([params["cls_b"], params["reg_b"], params["dir_b"]], axis=1)
    heads = jnp.einsum("bhwc,cd->bhwd", fused, hw,
                       precision=jax.lax.Precision.HIGHEST) + hb[0]
    heads = jnp.transpose(heads, (0, 3, 1, 2))
    return heads[:, :a], heads[:, a:8 * a], heads[:, 8 * a:8 * a + nb * a]


# ----------------------------------------------------------------------------
# Main
# ----------------------------------------------------------------------------
if __name__ == "__main__":
    key = jax.random.PRNGKey(0)
    ks = jax.random.split(key, 9)

    # small shapes consistent with the module's data flow
    N_AGENTS, C_IN, H, W = 3, 8, 16, 32       # encoder output (pe expects C_IN % 4 == 0)
    IN_HEAD = 64                              # avg_conv output / head input channels
    ANCHOR = 2
    NUM_BINS = 2
    record_len = [2, 1]                       # sample 0: 2 agents, sample 1: 1 agent

    params = {
        "avg_conv_w": jax.random.normal(ks[0], (C_IN, IN_HEAD), jnp.float32) * 0.1,
        "avg_conv_b": jax.random.normal(ks[1], (1, IN_HEAD), jnp.float32) * 0.1,
        "cls_w": jax.random.normal(ks[2], (IN_HEAD, ANCHOR), jnp.float32) * 0.1,
        "cls_b": jax.random.normal(ks[3], (1, ANCHOR), jnp.float32) * 0.1,
        "reg_w": jax.random.normal(ks[4], (IN_HEAD, 7 * ANCHOR), jnp.float32) * 0.1,
        "reg_b": jax.random.normal(ks[5], (1, 7 * ANCHOR), jnp.float32) * 0.1,
        "dir_w": jax.random.normal(ks[6], (IN_HEAD, NUM_BINS * ANCHOR), jnp.float32) * 0.1,
        "dir_b": jax.random.normal(ks[7], (1, NUM_BINS * ANCHOR), jnp.float32) * 0.1,
        "anchor_number": ANCHOR,
        "num_bins": NUM_BINS,
    }

    feature = jax.random.normal(ks[8], (N_AGENTS, C_IN, H, W), jnp.float32)

    out = heter_pyramid_collab_vfe33_forward(feature, record_len, params)
    jax.block_until_ready(out["cls_preds"])
    jax.block_until_ready(out["reg_preds"])
    jax.block_until_ready(out["dir_preds"])

    B = len(record_len)
    assert out["cls_preds"].shape == (B, ANCHOR, H, W)
    assert out["reg_preds"].shape == (B, 7 * ANCHOR, H, W)
    assert out["dir_preds"].shape == (B, NUM_BINS * ANCHOR, H, W)

    # numerical check against a pure-JAX reference (un-folded formulation)
    ref_cls, ref_reg, ref_dir = _reference(feature, record_len, params)
    for got, ref in ((out["cls_preds"], ref_cls),
                     (out["reg_preds"], ref_reg),
                     (out["dir_preds"], ref_dir)):
        err = jnp.max(jnp.abs(got - ref)) / (jnp.max(jnp.abs(ref)) + 1e-6)
        assert float(err) < 1e-2, f"relative error too large: {float(err)}"

    print("KERNEL_OK")
</pallas_src>

<mosaic_0001>
module attributes {stable_mosaic.version = 11 : i64} {
  func.func @_fused_kernel(%arg0: i32, %arg1: i32, %arg2: i32, %arg3: memref<2xi32, #tpu.memory_space<smem>>, %arg4: memref<2xi32, #tpu.memory_space<smem>>, %arg5: memref<1x8x512xf32, #tpu.memory_space<vmem>>, %arg6: memref<64x8xf32, #tpu.memory_space<vmem>>, %arg7: memref<24x64xf32, #tpu.memory_space<vmem>>, %arg8: memref<24x512xf32, #tpu.memory_space<vmem>>, %arg9: memref<1x24x512xf32, #tpu.memory_space<vmem>>, %arg10: memref<64x512xf32, #tpu.memory_space<vmem>>) attributes {dimension_semantics = [#tpu.dimension_semantics<parallel>, #tpu.dimension_semantics<parallel>, #tpu.dimension_semantics<arbitrary>], iteration_bounds = array<i64: 2, 1, 2>, scalar_prefetch = 2 : i64, scratch_operands = 1 : i64, tpu.core_type = #tpu.core_type<tc>, window_params = [{transform_indices = @transform_0, window_bounds = array<i64: 1, 8, 512>}, {pipeline_mode = #tpu.pipeline_mode<synchronous>, transform_indices = @transform_1, window_bounds = array<i64: 64, 8>}, {pipeline_mode = #tpu.pipeline_mode<synchronous>, transform_indices = @transform_2, window_bounds = array<i64: 24, 64>}, {transform_indices = @transform_3, window_bounds = array<i64: 24, 512>}, {transform_indices = @transform_4, window_bounds = array<i64: 1, 24, 512>}]} {
    %0 = arith.index_cast %arg0 : i32 to index
    %1 = memref.load %arg3[%0] : memref<2xi32, #tpu.memory_space<smem>>
    %c0_i32 = arith.constant 0 : i32
    %2 = arith.cmpi eq, %arg2, %c0_i32 : i32
    %3 = arith.extui %2 : i1 to i32
    %c0_i32_0 = arith.constant 0 : i32
    %4 = arith.cmpi ne, %3, %c0_i32_0 : i32
    scf.if %4 {
      %c0 = arith.constant 0 : index
      %c0_4 = arith.constant 0 : index
      %13 = vector.load %arg6[%c0, %c0_4] : memref<64x8xf32, #tpu.memory_space<vmem>>, vector<64x8xf32>
      %c0_5 = arith.constant 0 : index
      %c0_6 = arith.constant 0 : index
      %c0_7 = arith.constant 0 : index
      %14 = vector.load %arg5[%c0_5, %c0_6, %c0_7] : memref<1x8x512xf32, #tpu.memory_space<vmem>>, vector<1x8x512xf32>
      %15 = vector.shape_cast %14 : vector<1x8x512xf32> to vector<8x512xf32>
      %cst = arith.constant dense<0.000000e+00> : vector<64x512xf32>
      %16 = tpu.matmul %13, %15, %cst {dimension_numbers = #tpu.dot_dimension_numbers<[1], [0], [0], [1], [0, 0, 1, 1], [], []>} : vector<64x8xf32>, vector<8x512xf32>, vector<64x512xf32> -> vector<64x512xf32>
      %c0_8 = arith.constant 0 : index
      %c0_9 = arith.constant 0 : index
      %17 = vector.load %arg10[%c0_8, %c0_9] : memref<64x512xf32, #tpu.memory_space<vmem>>, vector<64x512xf32>
      tpu.vector_store %arg10[%c0_8, %c0_9], %16 {strides = array<i32>} : memref<64x512xf32, #tpu.memory_space<vmem>>, vector<64x512xf32>,
    } else {
    }
    %c0_i32_1 = arith.constant 0 : i32
    %5 = arith.cmpi sgt, %arg2, %c0_i32_1 : i32
    %6 = arith.cmpi slt, %arg2, %1 : i32
    %7 = arith.andi %5, %6 : i1
    %8 = arith.extui %7 : i1 to i32
    %c0_i32_2 = arith.constant 0 : i32
    %9 = arith.cmpi ne, %8, %c0_i32_2 : i32
    scf.if %9 {
      %c0 = arith.constant 0 : index
      %c0_4 = arith.constant 0 : index
      %13 = vector.load %arg6[%c0, %c0_4] : memref<64x8xf32, #tpu.memory_space<vmem>>, vector<64x8xf32>
      %c0_5 = arith.constant 0 : index
      %c0_6 = arith.constant 0 : index
      %c0_7 = arith.constant 0 : index
      %14 = vector.load %arg5[%c0_5, %c0_6, %c0_7] : memref<1x8x512xf32, #tpu.memory_space<vmem>>, vector<1x8x512xf32>
      %15 = vector.shape_cast %14 : vector<1x8x512xf32> to vector<8x512xf32>
      %cst = arith.constant dense<0.000000e+00> : vector<64x512xf32>
      %16 = tpu.matmul %13, %15, %cst {dimension_numbers = #tpu.dot_dimension_numbers<[1], [0], [0], [1], [0, 0, 1, 1], [], []>} : vector<64x8xf32>, vector<8x512xf32>, vector<64x512xf32> -> vector<64x512xf32>
      %c0_8 = arith.constant 0 : index
      %c0_9 = arith.constant 0 : index
      %17 = vector.load %arg10[%c0_8, %c0_9] : memref<64x512xf32, #tpu.memory_space<vmem>>, vector<64x512xf32>
      %18 = arith.maximumf %17, %16 : vector<64x512xf32>
      %c0_10 = arith.constant 0 : index
      %c0_11 = arith.constant 0 : index
      %19 = vector.load %arg10[%c0_10, %c0_11] : memref<64x512xf32, #tpu.memory_space<vmem>>, vector<64x512xf32>
      tpu.vector_store %arg10[%c0_10, %c0_11], %18 {strides = array<i32>} : memref<64x512xf32, #tpu.memory_space<vmem>>, vector<64x512xf32>,
    } else {
    }
    %c1_i32 = arith.constant 1 : i32
    %10 = arith.cmpi eq, %arg2, %c1_i32 : i32
    %11 = arith.extui %10 : i1 to i32
    %c0_i32_3 = arith.constant 0 : i32
    %12 = arith.cmpi ne, %11, %c0_i32_3 : i32
    scf.if %12 {
      %c0 = arith.constant 0 : index
      %c0_4 = arith.constant 0 : index
      %13 = vector.load %arg7[%c0, %c0_4] : memref<24x64xf32, #tpu.memory_space<vmem>>, vector<24x64xf32>
      %c0_5 = arith.constant 0 : index
      %c0_6 = arith.constant 0 : index
      %14 = vector.load %arg10[%c0_5, %c0_6] : memref<64x512xf32, #tpu.memory_space<vmem>>, vector<64x512xf32>
      %cst = arith.constant dense<0.000000e+00> : vector<24x512xf32>
      %15 = tpu.matmul %13, %14, %cst {dimension_numbers = #tpu.dot_dimension_numbers<[1], [0], [0], [1], [0, 0, 1, 1], [], []>} : vector<24x64xf32>, vector<64x512xf32>, vector<24x512xf32> -> vector<24x512xf32>
      %c0_7 = arith.constant 0 : index
      %c0_8 = arith.constant 0 : index
      %16 = vector.load %arg8[%c0_7, %c0_8] : memref<24x512xf32, #tpu.memory_space<vmem>>, vector<24x512xf32>
      %17 = arith.addf %15, %16 : vector<24x512xf32>
      %c0_9 = arith.constant 0 : index
      %c0_10 = arith.constant 0 : index
      %c0_11 = arith.constant 0 : index
      %18 = vector.load %arg9[%c0_9, %c0_10, %c0_11] : memref<1x24x512xf32, #tpu.memory_space<vmem>>, vector<1x24x512xf32>
      %19 = vector.shape_cast %18 : vector<1x24x512xf32> to vector<24x512xf32>
      %20 = vector.shape_cast %17 : vector<24x512xf32> to vector<1x24x512xf32>
      tpu.vector_store %arg9[%c0_9, %c0_10, %c0_11], %20 {strides = array<i32>} : memref<1x24x512xf32, #tpu.memory_space<vmem>>, vector<1x24x512xf32>,
    } else {
    }
    return
  }
  func.func @transform_0(%arg0: i32, %arg1: i32, %arg2: i32, %arg3: memref<2xi32, #tpu.memory_space<smem>>, %arg4: memref<2xi32, #tpu.memory_space<smem>>) -> (i32, i32, i32) {
    %0 = arith.index_cast %arg0 : i32 to index
    %1 = memref.load %arg4[%0] : memref<2xi32, #tpu.memory_space<smem>>
    %2 = arith.index_cast %arg0 : i32 to index
    %3 = memref.load %arg3[%2] : memref<2xi32, #tpu.memory_space<smem>>
    %c1_i32 = arith.constant 1 : i32
    %4 = arith.subi %3, %c1_i32 : i32
    %5 = arith.minsi %arg2, %4 : i32
    %6 = arith.addi %1, %5 : i32
    %c0_i32 = arith.constant 0 : i32
    %c0_i32_0 = arith.constant 0 : i32
    return %6, %c0_i32, %arg1 : i32, i32, i32
  }
  func.func @transform_1(%arg0: i32, %arg1: i32, %arg2: i32, %arg3: memref<2xi32, #tpu.memory_space<smem>>, %arg4: memref<2xi32, #tpu.memory_space<smem>>) -> (i32, i32) {
    %c0_i32 = arith.constant 0 : i32
    %c0_i32_0 = arith.constant 0 : i32
    %c0_i32_1 = arith.constant 0 : i32
    return %c0_i32, %c0_i32_0 : i32, i32
  }
  func.func @transform_2(%arg0: i32, %arg1: i32, %arg2: i32, %arg3: memref<2xi32, #tpu.memory_space<smem>>, %arg4: memref<2xi32, #tpu.memory_space<smem>>) -> (i32, i32) {
    %c0_i32 = arith.constant 0 : i32
    %c0_i32_0 = arith.constant 0 : i32
    %c0_i32_1 = arith.constant 0 : i32
    return %c0_i32, %c0_i32_0 : i32, i32
  }
  func.func @transform_3(%arg0: i32, %arg1: i32, %arg2: i32, %arg3: memref<2xi32, #tpu.memory_space<smem>>, %arg4: memref<2xi32, #tpu.memory_space<smem>>) -> (i32, i32) {
    %c0_i32 = arith.constant 0 : i32
    %c0_i32_0 = arith.constant 0 : i32
    return %c0_i32, %arg1 : i32, i32
  }
  func.func @transform_4(%arg0: i32, %arg1: i32, %arg2: i32, %arg3: memref<2xi32, #tpu.memory_space<smem>>, %arg4: memref<2xi32, #tpu.memory_space<smem>>) -> (i32, i32, i32) {
    %c0_i32 = arith.constant 0 : i32
    %c0_i32_0 = arith.constant 0 : i32
    return %arg0, %c0_i32, %arg1 : i32, i32, i32
  }
}

</mosaic_0001>

<llo_original>
// kernel: tpu_custom_call.1
$region0: #{tpu_custom_call.1}
  #allocation0 [shape = 'u32[]', space=smem, size = 0x4, offset = 0x4, fixed_abs, tag = 'smem constant byte address 0x4 - core index']
  #allocation1 [shape = 'u32[144,128]{1,0:T(1,128)}', space=vmem, size = 0x12000, scoped, tag = 'internal scratch']
  #allocation2 [shape = 'f32[64,512]{1,0:T(8,128)}', space=vmem, size = 0x20000, scoped, tag = 'scratch operand']
  #allocation3 [shape = 's32[1]{0}', space=sflag, size = 0x4, scoped, tag = 'scoped memory for tpu_custom_call.1']
  #allocation4 [shape = 'u8[512]{0}', space=smem, size = 0x200, scoped, tag = 'prefetched SMEM operand 0']
  #allocation5 [shape = 'u8[512]{0}', space=smem, size = 0x200, scoped, tag = 'prefetched SMEM operand 1']
  %s0 = inlined_call_operand.vmem [shape: s32[2], index: 0, kind: input, shape index: {}]
  %s1 = inlined_call_operand.vmem [shape: s32[2], index: 1, kind: input, shape index: {}]
  %s2 = inlined_call_operand.hbm [shape: f32[3,8,512], index: 2, kind: input, shape index: {}]
  %s3 = inlined_call_operand.vmem [shape: f32[64,8], index: 3, kind: input, shape index: {}]
  %s4 = inlined_call_operand.vmem [shape: f32[24,64], index: 4, kind: input, shape index: {}]
  %s5 = inlined_call_operand.hbm [shape: f32[24,512], index: 5, kind: input, shape index: {}]
  %s6 = inlined_call_operand.hbm [shape: f32[2,24,512], index: 6, kind: output, shape index: {}]
  %s7 = sld [smem:[#allocation0]]
  $region69: #{tpu_custom_call.1} parent=0
    _
  %s9 = ssub.s32 1, %s7
  %s10 = scalar_select 0, %s9, %s7
  %s11 = sshll.u32 %s0, 4
  %s12 = int_to_ptr.vmem [resolvable:$true] %s11
  %14 = dma.vmem_to_smem %s12, 16, [#allocation4], [#allocation3]
  %s15 = sshll.u32 %s1, 4
  %s16 = int_to_ptr.vmem [resolvable:$true] %s15
  %18 = dma.vmem_to_smem %s16, 16, [#allocation5], [#allocation3]
  %19 = dma.done [#allocation3], 32
  %20 = sfence
  $region1: #{tpu_custom_call.1} parent=0
    #allocation6 [shape = 'u8[32768]{0}', space=vmem, size = 0x8000, scoped, tag = 'input window, operand 2']
    #allocation7 [shape = 's32[2]{0}', space=sflag, size = 0x8, scoped, tag = 'scoped memory for tpu_custom_call.1']
    #allocation8 [shape = 's32[2]{0}', space=sflag, size = 0x8, scoped, tag = 'scoped memory for tpu_custom_call.1']
    #allocation9 [shape = 'u8[49152]{0}', space=vmem, size = 0xc000, scoped, tag = 'input window, operand 5, single buffered']
    #allocation10 [shape = 's32[1]{0}', space=sflag, size = 0x4, scoped, tag = 'scoped memory for tpu_custom_call.1']
    #allocation11 [shape = 'u8[98304]{0}', space=vmem, size = 0x18000, scoped, tag = 'output window, operand 0']
    %21 = vsyncpa [#allocation7], 0
    %s22 = scalar_lea.sflag [#allocation7], 1
    %23 = vsyncpa %s22, 0
    %24 = vsyncpa [#allocation10], 0
    %25 = vsyncpa [#allocation8], 0
    %s26 = scalar_lea.sflag [#allocation8], 1
    %27 = vsyncpa %s26, 0
    loop: start=0, step=1, limit=6
    $region2: #{tpu_custom_call.1} parent=1 // loop_pre_header
      _
    $region3: #{tpu_custom_call.1} parent=1 // loop_header
      %s29 = sphi 0, %s33
      %p30 = scmp.ge.s32.totalorder %s29, 6
      %s36 = sphi 0, %s55
      %s37 = sphi 0, %s51
      %s38 = sphi 0, %s47
      %s39 = sphi 0, %s36
      %s40 = sphi 0, %s37
      %s41 = sphi 0, %s38
      %s42 = sphi 0, %s39
      %s43 = sphi 0, %s40
      %s44 = sphi 0, %s41
      %s72 = sphi 0, %s74
      %s75 = sphi 0, %s72
      %s76 = sphi 0, %s75
      %s92 = sphi 0, %s76
      %s96 = sphi 0, %s96
      %s98 = sphi 0, %s96
      %s99 = sphi 0, %s98
      %s113 = sphi 0, %s99
      %s117 = sphi 0, %s117
      %s119 = sphi 0, %s117
      %s120 = sphi 0, %s119
      %s134 = sphi 0, %s120
      %s140 = sphi 0, %s142
      %s143 = sphi 0, %s140
      %s144 = sphi 0, %s143
      %s160 = sphi 0, %s144
      %s168 = sphi 0, %s170
      %s171 = sphi 0, %s168
      %s172 = sphi 0, %s171
      %s188 = sphi 0, %s172
    $region4: #{tpu_custom_call.1} parent=1 // loop_header_branch
      %32 = sbr.rel (%p30) target = $region8
    $region5: #{tpu_custom_call.1} parent=1 // loop_body
      %s34 = ssub.s32 %s29, 1
      %s35 = ssub.s32 %s29, 2
      %s45 = sadd.s32 1, %s38
      %p46 = scmp.ge.s32.totalorder %s45, 2
      %s47 = scalar_select %p46, 0, %s45
      %s48 = sadd.s32 1, %s37
      %s49 = scalar_select %p46, %s48, %s37
      %p50 = scmp.ge.s32.totalorder %s49, 1
      %s51 = scalar_select %p50, 0, %s49
      %s52 = sadd.s32 1, %s36
      %s53 = scalar_select %p50, %s52, %s36
      %p54 = scmp.ge.s32.totalorder %s53, 2
      %s55 = scalar_select %p54, 0, %s53
      %s56 = sld [smem:[#allocation5 + %s36]]
      %s57 = sld [smem:[#allocation4 + %s36]]
      %s58 = ssub.s32 %s57, 1
      %p59 = scmp.lt.s32.totalorder %s38, %s58
      %s60 = scalar_select %p59, %s38, %s58
      %s61 = sadd.s32 %s56, %s60
      %s62 = sld [smem:[#allocation5 + %s55]]
      %s63 = sld [smem:[#allocation4 + %s55]]
      %s64 = ssub.s32 %s63, 1
      %p65 = scmp.lt.s32.totalorder %s47, %s64
      %s66 = scalar_select %p65, %s47, %s64
      %s67 = sadd.s32 %s62, %s66
      %s68 = ssub.s32 %s61, %s67
      %s69 = ssub.s32 %s37, %s51
      %s70 = sor.u32 %s68, %s69
      %p71 = scmp.eq.s32.totalorder %s70, 0
      %s73 = sadd.s32 %s72, 1
      %s74 = scalar_select %p71, %s72, %s73
      %p77 = pneg %p71
      %p78 = scmp.eq.s32.totalorder %s29, 3
      %p79 = por %p77, %p78
      %p80 = scmp.ne.s32.totalorder %s72, %s75
      %p81 = scmp.eq.s32.totalorder %s29, 0
      %p82 = por %p80, %p81
      %p83 = scmp.ne.s32.totalorder %s72, %s75
      %p84 = scmp.eq.s32.totalorder %s34, 3
      %p85 = por %p83, %p84
      %p86 = scmp.ne.s32.totalorder %s75, %s76
      %p87 = scmp.eq.s32.totalorder %s34, 0
      %p88 = por %p86, %p87
      %p89 = scmp.ne.s32.totalorder %s75, %s76
      %p90 = scmp.eq.s32.totalorder %s35, 3
      %p91 = por %p89, %p90
      %p93 = scmp.ne.s32.totalorder %s76, %s92
      %p94 = scmp.eq.s32.totalorder %s35, 0
      %p95 = por %p93, %p94
      %s97 = sadd.s32 %s96, 1
      %p100 = scmp.eq.s32.totalorder %s29, 3
      %p101 = scmp.ne.s32.totalorder %s96, %s98
      %p102 = scmp.eq.s32.totalorder %s29, 0
      %p103 = por %p101, %p102
      %p104 = scmp.ne.s32.totalorder %s96, %s98
      %p105 = scmp.eq.s32.totalorder %s34, 3
      %p106 = por %p104, %p105
      %p107 = scmp.ne.s32.totalorder %s98, %s99
      %p108 = scmp.eq.s32.totalorder %s34, 0
      %p109 = por %p107, %p108
      %p110 = scmp.ne.s32.totalorder %s98, %s99
      %p111 = scmp.eq.s32.totalorder %s35, 3
      %p112 = por %p110, %p111
      %p114 = scmp.ne.s32.totalorder %s99, %s113
      %p115 = scmp.eq.s32.totalorder %s35, 0
      %p116 = por %p114, %p115
      %s118 = sadd.s32 %s117, 1
      %p121 = scmp.eq.s32.totalorder %s29, 3
      %p122 = scmp.ne.s32.totalorder %s117, %s119
      %p123 = scmp.eq.s32.totalorder %s29, 0
      %p124 = por %p122, %p123
      %p125 = scmp.ne.s32.totalorder %s117, %s119
      %p126 = scmp.eq.s32.totalorder %s34, 3
      %p127 = por %p125, %p126
      %p128 = scmp.ne.s32.totalorder %s119, %s120
      %p129 = scmp.eq.s32.totalorder %s34, 0
      %p130 = por %p128, %p129
      %p131 = scmp.ne.s32.totalorder %s119, %s120
      %p132 = scmp.eq.s32.totalorder %s35, 3
      %p133 = por %p131, %p132
      %p135 = scmp.ne.s32.totalorder %s120, %s134
      %p136 = scmp.eq.s32.totalorder %s35, 0
      %p137 = por %p135, %p136
      %s138 = ssub.s32 %s37, %s51
      %p139 = scmp.eq.s32.totalorder %s138, 0
      %s141 = sadd.s32 %s140, 1
      %s142 = scalar_select %p139, %s140, %s141
      %p145 = pneg %p139
      %p146 = scmp.eq.s32.totalorder %s29, 3
      %p147 = por %p145, %p146
      %p148 = scmp.ne.s32.totalorder %s140, %s143
      %p149 = scmp.eq.s32.totalorder %s29, 0
      %p150 = por %p148, %p149
      %p151 = scmp.ne.s32.totalorder %s140, %s143
      %p152 = scmp.eq.s32.totalorder %s34, 3
      %p153 = por %p151, %p152
      %p154 = scmp.ne.s32.totalorder %s143, %s144
      %p155 = scmp.eq.s32.totalorder %s34, 0
      %p156 = por %p154, %p155
      %p157 = scmp.ne.s32.totalorder %s143, %s144
      %p158 = scmp.eq.s32.totalorder %s35, 3
      %p159 = por %p157, %p158
      %p161 = scmp.ne.s32.totalorder %s144, %s160
      %p162 = scmp.eq.s32.totalorder %s35, 0
      %p163 = por %p161, %p162
      %s164 = ssub.s32 %s36, %s55
      %s165 = ssub.s32 %s37, %s51
      %s166 = sor.u32 %s164, %s165
      %p167 = scmp.eq.s32.totalorder %s166, 0
      %s169 = sadd.s32 %s168, 1
      %s170 = scalar_select %p167, %s168, %s169
      %p173 = pneg %p167
      %p174 = scmp.eq.s32.totalorder %s29, 3
      %p175 = por %p173, %p174
      %p176 = scmp.ne.s32.totalorder %s168, %s171
      %p177 = scmp.eq.s32.totalorder %s29, 0
      %p178 = por %p176, %p177
      %p179 = scmp.ne.s32.totalorder %s168, %s171
      %p180 = scmp.eq.s32.totalorder %s34, 3
      %p181 = por %p179, %p180
      %p182 = scmp.ne.s32.totalorder %s171, %s172
      %p183 = scmp.eq.s32.totalorder %s34, 0
      %p184 = por %p182, %p183
      %p185 = scmp.ne.s32.totalorder %s171, %s172
      %p186 = scmp.eq.s32.totalorder %s35, 3
      %p187 = por %p185, %p186
      %p189 = scmp.ne.s32.totalorder %s172, %s188
      %p190 = scmp.eq.s32.totalorder %s35, 0
      %p191 = por %p189, %p190
      %p192 = scmp.le.s32.totalorder 1, %s29
      %p193 = scmp.lt.s32.totalorder %s29, 5
      %p194 = pnand %p192, %p193
      %p195 = pneg %p194
      // Predicated region
      $region9: #{tpu_custom_call.1} parent=5 // pred_check
        _
      $region10: #{tpu_custom_call.1} parent=5 // pred_check_branch
        %197 = sbr.rel (%p194) target = $region12
      $region11: #{tpu_custom_call.1} parent=5 // pred_region
        %s198 = ssub.s32 %s29, 1
        // Predicated region
        $region13: #{tpu_custom_call.1} parent=11 // pred_check
          %p199 = pneg %p109
        $region14: #{tpu_custom_call.1} parent=11 // pred_check_branch
          %201 = sbr.rel (%p199) target = $region16
        $region15: #{tpu_custom_call.1} parent=11 // pred_region
          _
        $region16: #{tpu_custom_call.1} parent=11 // pred_fallthru
          _
        // Predicated region
        $region17: #{tpu_custom_call.1} parent=11 // pred_check
          %p202 = pneg %p130
        $region18: #{tpu_custom_call.1} parent=11 // pred_check_branch
          %204 = sbr.rel (%p202) target = $region20
        $region19: #{tpu_custom_call.1} parent=11 // pred_region
          _
        $region20: #{tpu_custom_call.1} parent=11 // pred_fallthru
          _
        // Predicated region
        $region21: #{tpu_custom_call.1} parent=11 // pred_check
          %p205 = pneg %p156
        $region22: #{tpu_custom_call.1} parent=11 // pred_check_branch
          %207 = sbr.rel (%p205) target = $region24
        $region23: #{tpu_custom_call.1} parent=11 // pred_region
          %s208 = smul.u32 4, %s40
          %s210 = ssub.s32 1536, 1536
          %211 = vsyncadd [#allocation10], %s210
          %s212 = smul.addr %s208, 128
          %s213 = scalar_lea.hbm %s5, %s212
          %s214 = sshll.u32 [#allocation9], 4
          %s215 = int_to_ptr.vmem [resolvable:$true] %s214
          %220 = dma.hbm_to_vmem [thread:$0]  %s213, 1536, %s215, [#allocation10], 512, 512, 32
        $region24: #{tpu_custom_call.1} parent=11 // pred_fallthru
          _
      $region12: #{tpu_custom_call.1} parent=5 // pred_fallthru
        _
      %p221 = scmp.lt.s32.totalorder %s29, 4
      // Predicated region
      $region25: #{tpu_custom_call.1} parent=5 // pred_check
        %p222 = pneg %p221
      $region26: #{tpu_custom_call.1} parent=5 // pred_check_branch
        %224 = sbr.rel (%p222) target = $region28
      $region27: #{tpu_custom_call.1} parent=5 // pred_region
        // Predicated region
        $region29: #{tpu_custom_call.1} parent=27 // pred_check
          %p225 = pneg %p82
        $region30: #{tpu_custom_call.1} parent=27 // pred_check_branch
          %227 = sbr.rel (%p225) target = $region32
        $region31: #{tpu_custom_call.1} parent=27 // pred_region
          %s228 = sand.u32 %s72, 1
          %s229 = scalar_lea.sflag [#allocation7], %s228
          %s230 = sand.u32 %s72, 1
          %s231 = smul.addr %s230, 32
          %s232 = scalar_lea.vmem [#allocation6], %s231
          %s233 = sld [smem:[#allocation5 + %s36]]
          %s234 = sld [smem:[#allocation4 + %s36]]
          %s235 = ssub.s32 %s234, 1
          %p236 = scmp.lt.s32.totalorder %s38, %s235
          %s237 = scalar_select %p236, %s38, %s235
          %s238 = sadd.s32 %s233, %s237
          %s239 = smul.u32 4, %s37
          %s241 = ssub.s32 512, 512
          %242 = vsyncadd %s229, %s241
          %s243 = smul.addr %s238, 4
          %s244 = sadd.s32 %s239, %s243
          %s245 = smul.addr %s244, 128
          %s246 = scalar_lea.hbm %s2, %s245
          %s248 = sshll.u32 %s232, 4
          %s249 = int_to_ptr.vmem [resolvable:$true] %s248
          %251 = dma.hbm_to_vmem [thread:$0]  %s246, 512, %s249, %s229
        $region32: #{tpu_custom_call.1} parent=27 // pred_fallthru
          _
      $region28: #{tpu_custom_call.1} parent=5 // pred_fallthru
        _
      %p252 = scmp.le.s32.totalorder 1, %s29
      %p253 = scmp.lt.s32.totalorder %s29, 5
      %p254 = pnand %p252, %p253
      %p255 = pneg %p254
      // Predicated region
      $region33: #{tpu_custom_call.1} parent=5 // pred_check
        _
      $region34: #{tpu_custom_call.1} parent=5 // pred_check_branch
        %257 = sbr.rel (%p254) target = $region36
      $region35: #{tpu_custom_call.1} parent=5 // pred_region
        %s258 = ssub.s32 %s29, 1
        %s259 = sand.u32 %s75, 1
        %s260 = scalar_lea.sflag [#allocation7], %s259
        %s261 = sand.u32 %s75, 1
        %s262 = smul.addr %s261, 32
        %s263 = scalar_lea.vmem [#allocation6], %s262
        // Predicated region
        $region37: #{tpu_custom_call.1} parent=35 // pred_check
          %p264 = pneg %p88
        $region38: #{tpu_custom_call.1} parent=35 // pred_check_branch
          %266 = sbr.rel (%p264) target = $region40
        $region39: #{tpu_custom_call.1} parent=35 // pred_region
          %267 = dma.done %s260, 512
        $region40: #{tpu_custom_call.1} parent=35 // pred_fallthru
          _
        // Predicated region
        $region41: #{tpu_custom_call.1} parent=35 // pred_check
          %p268 = pneg %p156
        $region42: #{tpu_custom_call.1} parent=35 // pred_check_branch
          %270 = sbr.rel (%p268) target = $region44
        $region43: #{tpu_custom_call.1} parent=35 // pred_region
          %271 = dma.done [#allocation10], 1536
        $region44: #{tpu_custom_call.1} parent=35 // pred_fallthru
          _
        %s272 = sand.u32 %s75, 1
        %s273 = scalar_lea.sflag [#allocation7], %s272
        %s274 = sand.u32 %s75, 1
        %s275 = smul.addr %s274, 32
        %s276 = scalar_lea.vmem [#allocation6], %s275
        %p277 = pneg %p88
        %p278 = pneg %p85
        %p279 = pneg %p109
        %p280 = pneg %p106
        %p281 = pneg %p130
        %p282 = pneg %p127
        %p283 = pneg %p156
        %p284 = pneg %p153
        %p285 = pneg %p184
        %p286 = pneg %p181
        %s287 = sand.u32 %s171, 1
        %s288 = scalar_lea.sflag [#allocation8], %s287
        %s289 = sand.u32 %s171, 1
        %s290 = smul.addr %s289, 96
        %s291 = scalar_lea.vmem [#allocation11], %s290
        %s292 = sld [smem:[#allocation5 + %s39]]
        %s293 = sld [smem:[#allocation4 + %s39]]
        %s294 = ssub.s32 %s293, 1
        %p295 = scmp.lt.s32.totalorder %s41, %s294
        %s296 = scalar_select %p295, %s41, %s294
        %s297 = sadd.s32 %s292, %s296
        %s298 = smul.u32 4, %s40
        %s299 = smul.u32 4, %s40
        %s300 = smul.u32 4, %s40
        %s301 = sld [smem:[#allocation4 + %s39]]
        %p302 = scmp.eq.s32.totalorder %s41, 0
        // Predicated region
        $region45: #{tpu_custom_call.1} parent=35 // pred_check
          %p303 = pneg %p302
        $region46: #{tpu_custom_call.1} parent=35 // pred_check_branch
          %305 = sbr.rel (%p303) target = $region48
        $region47: #{tpu_custom_call.1} parent=35 // pred_region
          %v306 = vld [vmem:[%s3] sm:$0xff]
          %v307 = vld [vmem:[%s3 + $0x8] sm:$0xff]
          %v308 = vld [vmem:[%s3 + $0x10] sm:$0xff]
          %v309 = vld [vmem:[%s3 + $0x18] sm:$0xff]
          %v310 = vld [vmem:[%s3 + $0x20] sm:$0xff]
          %v311 = vld [vmem:[%s3 + $0x28] sm:$0xff]
          %v312 = vld [vmem:[%s3 + $0x30] sm:$0xff]
          %v313 = vld [vmem:[%s3 + $0x38] sm:$0xff]
          %v314 = vld [vmem:[%s263] sm:$0xff]
          %v315 = vld [vmem:[%s263 + $0x8] sm:$0xff]
          %v316 = vld [vmem:[%s263 + $0x10] sm:$0xff]
          %v317 = vld [vmem:[%s263 + $0x18] sm:$0xff]
          %vm318 = vcmask 64512
          %v320 = vsel %vm318, %v306, 0
          %v323 = vsel %vm318, %v307, 0
          %v326 = vsel %vm318, %v308, 0
          %v329 = vsel %vm318, %v309, 0
          %v332 = vsel %vm318, %v310, 0
          %v335 = vsel %vm318, %v311, 0
          %v338 = vsel %vm318, %v312, 0
          %v341 = vsel %vm318, %v313, 0
          %343 = vmatprep.subr.mxu0 0.0
          %344 = vmatpush1.msra.mxu0 0.0
          %345 = vmatprep.subr.mxu0 0.0
          %346 = vmatpush1.msra.mxu0 0.0
          %347 = vmatprep.subr.mxu0 0.0
          %348 = vmatpush1.msra.mxu0 0.0
          %349 = vmatprep.subr.mxu0 0.0
          %350 = vmatpush1.msra.mxu0 0.0
          %351 = vmatprep.subr.mxu0 0.0
          %352 = vmatpush1.msra.mxu0 0.0
          %353 = vmatprep.subr.mxu0 0.0
          %354 = vmatpush1.msra.mxu0 0.0
          %355 = vmatprep.subr.mxu0 0.0
          %356 = vmatpush1.msra.mxu0 0.0
          %357 = vmatprep.subr.mxu0 0.0
          %358 = vmatpush1.msra.mxu0 0.0
          %359 = vmatprep.subr.mxu0 0.0
          %360 = vmatpush1.msra.mxu0 0.0
          %361 = vmatprep.subr.mxu0 0.0
          %362 = vmatpush1.msra.mxu0 0.0
          %363 = vmatprep.subr.mxu0 0.0
          %364 = vmatpush1.msra.mxu0 0.0
          %365 = vmatprep.subr.mxu0 0.0
          %366 = vmatpush1.msra.mxu0 0.0
          %367 = vmatprep.subr.mxu0 0.0
          %368 = vmatpush1.msra.mxu0 0.0
          %369 = vmatprep.subr.mxu0 0.0
          %370 = vmatpush1.msra.mxu0 0.0
          %371 = vmatprep.subr.mxu0 0.0
          %372 = vmatpush1.msra.mxu0 0.0
          %373 = vmatprep.subr.mxu0 %v315
          %374 = vmatpush1.msra.mxu0 %v314
          %375 = vmatprep.subr.mxu0 0.0
          %376 = vmatpush2.msra.mxu0 0.0
          %377 = vmatprep.subr.mxu0 0.0
          %378 = vmatpush2.msra.mxu0 0.0
          %379 = vmatprep.subr.mxu0 0.0
          %380 = vmatpush2.msra.mxu0 0.0
          %381 = vmatprep.subr.mxu0 0.0
          %382 = vmatpush2.msra.mxu0 0.0
          %383 = vmatprep.subr.mxu0 0.0
          %384 = vmatpush2.msra.mxu0 0.0
          %385 = vmatprep.subr.mxu0 0.0
          %386 = vmatpush2.msra.mxu0 0.0
          %387 = vmatprep.subr.mxu0 0.0
          %388 = vmatpush2.msra.mxu0 0.0
          %389 = vmatprep.subr.mxu0 0.0
          %390 = vmatpush2.msra.mxu0 0.0
          %391 = vmatprep.subr.mxu0 0.0
          %392 = vmatpush2.msra.mxu0 0.0
          %393 = vmatprep.subr.mxu0 0.0
          %394 = vmatpush2.msra.mxu0 0.0
          %395 = vmatprep.subr.mxu0 0.0
          %396 = vmatpush2.msra.mxu0 0.0
          %397 = vmatprep.subr.mxu0 0.0
          %398 = vmatpush2.msra.mxu0 0.0
          %399 = vmatprep.subr.mxu0 0.0
          %400 = vmatpush2.msra.mxu0 0.0
          %401 = vmatprep.subr.mxu0 0.0
          %402 = vmatpush2.msra.mxu0 0.0
          %403 = vmatprep.subr.mxu0 0.0
          %404 = vmatpush2.msra.mxu0 0.0
          %405 = vmatprep.subr.mxu0 0.0
          %406 = vmatpush2.msra.mxu0 0.0
          %407 = vmatprep.mubr.f32.mxu0 0.0
          %408 = vmatmul.mubr.f32.gmra.mxu0 %v320
          %v409 = vpop.f32.mrf.mxu0
          %v410 = vadd.f32 0.0, %v409
          %v411 = vpop.f32.mrf.mxu0
          %v412 = vadd.f32 0.0, %v411
          %413 = vmatprep.mubr.f32.mxu0 0.0
          %414 = vmatmul.mubr.f32.gmra.mxu0 %v323
          %v415 = vpop.f32.mrf.mxu0
          %v416 = vadd.f32 0.0, %v415
          %v417 = vpop.f32.mrf.mxu0
          %v418 = vadd.f32 0.0, %v417
          %419 = vmatprep.mubr.f32.mxu0 0.0
          %420 = vmatmul.mubr.f32.gmra.mxu0 %v326
          %v421 = vpop.f32.mrf.mxu0
          %v422 = vadd.f32 0.0, %v421
          %v423 = vpop.f32.mrf.mxu0
          %v424 = vadd.f32 0.0, %v423
          %425 = vmatprep.mubr.f32.mxu0 0.0
          %426 = vmatmul.mubr.f32.gmra.mxu0 %v329
          %v427 = vpop.f32.mrf.mxu0
          %v428 = vadd.f32 0.0, %v427
          %v429 = vpop.f32.mrf.mxu0
          %v430 = vadd.f32 0.0, %v429
          %431 = vmatprep.mubr.f32.mxu0 0.0
          %432 = vmatmul.mubr.f32.gmra.mxu0 %v332
          %v433 = vpop.f32.mrf.mxu0
          %v434 = vadd.f32 0.0, %v433
          %v435 = vpop.f32.mrf.mxu0
          %v436 = vadd.f32 0.0, %v435
          %437 = vmatprep.mubr.f32.mxu0 0.0
          %438 = vmatmul.mubr.f32.gmra.mxu0 %v335
          %v439 = vpop.f32.mrf.mxu0
          %v440 = vadd.f32 0.0, %v439
          %v441 = vpop.f32.mrf.mxu0
          %v442 = vadd.f32 0.0, %v441
          %443 = vmatprep.mubr.f32.mxu0 0.0
          %444 = vmatmul.mubr.f32.gmra.mxu0 %v338
          %v445 = vpop.f32.mrf.mxu0
          %v446 = vadd.f32 0.0, %v445
          %v447 = vpop.f32.mrf.mxu0
          %v448 = vadd.f32 0.0, %v447
          %449 = vmatprep.mubr.f32.mxu0 0.0
          %450 = vmatmul.mubr.f32.gmra.mxu0 %v341
          %v451 = vpop.f32.mrf.mxu0
          %v452 = vadd.f32 0.0, %v451
          %v453 = vpop.f32.mrf.mxu0
          %v454 = vadd.f32 0.0, %v453
          %455 = vdwg.mxu0
          %456 = vmatprep.subr.mxu0 0.0
          %457 = vmatpush1.msra.mxu0 0.0
          %458 = vmatprep.subr.mxu0 0.0
          %459 = vmatpush1.msra.mxu0 0.0
          %460 = vmatprep.subr.mxu0 0.0
          %461 = vmatpush1.msra.mxu0 0.0
          %462 = vmatprep.subr.mxu0 0.0
          %463 = vmatpush1.msra.mxu0 0.0
          %464 = vmatprep.subr.mxu0 0.0
          %465 = vmatpush1.msra.mxu0 0.0
          %466 = vmatprep.subr.mxu0 0.0
          %467 = vmatpush1.msra.mxu0 0.0
          %468 = vmatprep.subr.mxu0 0.0
          %469 = vmatpush1.msra.mxu0 0.0
          %470 = vmatprep.subr.mxu0 0.0
          %471 = vmatpush1.msra.mxu0 0.0
          %472 = vmatprep.subr.mxu0 0.0
          %473 = vmatpush1.msra.mxu0 0.0
          %474 = vmatprep.subr.mxu0 0.0
          %475 = vmatpush1.msra.mxu0 0.0
          %476 = vmatprep.subr.mxu0 0.0
          %477 = vmatpush1.msra.mxu0 0.0
          %478 = vmatprep.subr.mxu0 0.0
          %479 = vmatpush1.msra.mxu0 0.0
          %480 = vmatprep.subr.mxu0 0.0
          %481 = vmatpush1.msra.mxu0 0.0
          %482 = vmatprep.subr.mxu0 0.0
          %483 = vmatpush1.msra.mxu0 0.0
          %484 = vmatprep.subr.mxu0 0.0
          %485 = vmatpush1.msra.mxu0 0.0
          %486 = vmatprep.subr.mxu0 %v317
          %487 = vmatpush1.msra.mxu0 %v316
          %488 = vmatprep.subr.mxu0 0.0
          %489 = vmatpush2.msra.mxu0 0.0
          %490 = vmatprep.subr.mxu0 0.0
          %491 = vmatpush2.msra.mxu0 0.0
          %492 = vmatprep.subr.mxu0 0.0
          %493 = vmatpush2.msra.mxu0 0.0
          %494 = vmatprep.subr.mxu0 0.0
          %495 = vmatpush2.msra.mxu0 0.0
          %496 = vmatprep.subr.mxu0 0.0
          %497 = vmatpush2.msra.mxu0 0.0
          %498 = vmatprep.subr.mxu0 0.0
          %499 = vmatpush2.msra.mxu0 0.0
          %500 = vmatprep.subr.mxu0 0.0
          %501 = vmatpush2.msra.mxu0 0.0
          %502 = vmatprep.subr.mxu0 0.0
          %503 = vmatpush2.msra.mxu0 0.0
          %504 = vmatprep.subr.mxu0 0.0
          %505 = vmatpush2.msra.mxu0 0.0
          %506 = vmatprep.subr.mxu0 0.0
          %507 = vmatpush2.msra.mxu0 0.0
          %508 = vmatprep.subr.mxu0 0.0
          %509 = vmatpush2.msra.mxu0 0.0
          %510 = vmatprep.subr.mxu0 0.0
          %511 = vmatpush2.msra.mxu0 0.0
          %512 = vmatprep.subr.mxu0 0.0
          %513 = vmatpush2.msra.mxu0 0.0
          %514 = vmatprep.subr.mxu0 0.0
          %515 = vmatpush2.msra.mxu0 0.0
          %516 = vmatprep.subr.mxu0 0.0
          %517 = vmatpush2.msra.mxu0 0.0
          %518 = vmatprep.subr.mxu0 0.0
          %519 = vmatpush2.msra.mxu0 0.0
          %520 = vmatprep.mubr.f32.mxu0 0.0
          %521 = vmatmul.mubr.f32.gmra.mxu0 %v320
          %v522 = vpop.f32.mrf.mxu0
          %v523 = vadd.f32 0.0, %v522
          %v524 = vpop.f32.mrf.mxu0
          %v525 = vadd.f32 0.0, %v524
          %526 = vmatprep.mubr.f32.mxu0 0.0
          %527 = vmatmul.mubr.f32.gmra.mxu0 %v323
          %v528 = vpop.f32.mrf.mxu0
          %v529 = vadd.f32 0.0, %v528
          %v530 = vpop.f32.mrf.mxu0
          %v531 = vadd.f32 0.0, %v530
          %532 = vmatprep.mubr.f32.mxu0 0.0
          %533 = vmatmul.mubr.f32.gmra.mxu0 %v326
          %v534 = vpop.f32.mrf.mxu0
          %v535 = vadd.f32 0.0, %v534
          %v536 = vpop.f32.mrf.mxu0
          %v537 = vadd.f32 0.0, %v536
          %538 = vmatprep.mubr.f32.mxu0 0.0
          %539 = vmatmul.mubr.f32.gmra.mxu0 %v329
          %v540 = vpop.f32.mrf.mxu0
          %v541 = vadd.f32 0.0, %v540
          %v542 = vpop.f32.mrf.mxu0
          %v543 = vadd.f32 0.0, %v542
          %544 = vmatprep.mubr.f32.mxu0 0.0
          %545 = vmatmul.mubr.f32.gmra.mxu0 %v332
          %v546 = vpop.f32.mrf.mxu0
          %v547 = vadd.f32 0.0, %v546
          %v548 = vpop.f32.mrf.mxu0
          %v549 = vadd.f32 0.0, %v548
          %550 = vmatprep.mubr.f32.mxu0 0.0
          %551 = vmatmul.mubr.f32.gmra.mxu0 %v335
          %v552 = vpop.f32.mrf.mxu0
          %v553 = vadd.f32 0.0, %v552
          %v554 = vpop.f32.mrf.mxu0
          %v555 = vadd.f32 0.0, %v554
          %556 = vmatprep.mubr.f32.mxu0 0.0
          %557 = vmatmul.mubr.f32.gmra.mxu0 %v338
          %v558 = vpop.f32.mrf.mxu0
          %v559 = vadd.f32 0.0, %v558
          %v560 = vpop.f32.mrf.mxu0
          %v561 = vadd.f32 0.0, %v560
          %562 = vmatprep.mubr.f32.mxu0 0.0
          %563 = vmatmul.mubr.f32.gmra.mxu0 %v341
          %v564 = vpop.f32.mrf.mxu0
          %v565 = vadd.f32 0.0, %v564
          %v566 = vpop.f32.mrf.mxu0
          %v567 = vadd.f32 0.0, %v566
          %568 = vdwg.mxu0
          %569 = vst [vmem:[#allocation2] sm:$0xff] %v410
          %570 = vst [vmem:[#allocation2 + $0x8] sm:$0xff] %v412
          %571 = vst [vmem:[#allocation2 + $0x10] sm:$0xff] %v523
          %572 = vst [vmem:[#allocation2 + $0x18] sm:$0xff] %v525
          %573 = vst [vmem:[#allocation2 + $0x20] sm:$0xff] %v416
          %574 = vst [vmem:[#allocation2 + $0x28] sm:$0xff] %v418
          %575 = vst [vmem:[#allocation2 + $0x30] sm:$0xff] %v529
          %576 = vst [vmem:[#allocation2 + $0x38] sm:$0xff] %v531
          %577 = vst [vmem:[#allocation2 + $0x40] sm:$0xff] %v422
          %578 = vst [vmem:[#allocation2 + $0x48] sm:$0xff] %v424
          %579 = vst [vmem:[#allocation2 + $0x50] sm:$0xff] %v535
          %580 = vst [vmem:[#allocation2 + $0x58] sm:$0xff] %v537
          %581 = vst [vmem:[#allocation2 + $0x60] sm:$0xff] %v428
          %582 = vst [vmem:[#allocation2 + $0x68] sm:$0xff] %v430
          %583 = vst [vmem:[#allocation2 + $0x70] sm:$0xff] %v541
          %584 = vst [vmem:[#allocation2 + $0x78] sm:$0xff] %v543
          %585 = vst [vmem:[#allocation2 + $0x80] sm:$0xff] %v434
          %586 = vst [vmem:[#allocation2 + $0x88] sm:$0xff] %v436
          %587 = vst [vmem:[#allocation2 + $0x90] sm:$0xff] %v547
          %588 = vst [vmem:[#allocation2 + $0x98] sm:$0xff] %v549
          %589 = vst [vmem:[#allocation2 + $0xa0] sm:$0xff] %v440
          %590 = vst [vmem:[#allocation2 + $0xa8] sm:$0xff] %v442
          %591 = vst [vmem:[#allocation2 + $0xb0] sm:$0xff] %v553
          %592 = vst [vmem:[#allocation2 + $0xb8] sm:$0xff] %v555
          %593 = vst [vmem:[#allocation2 + $0xc0] sm:$0xff] %v446
          %594 = vst [vmem:[#allocation2 + $0xc8] sm:$0xff] %v448
          %595 = vst [vmem:[#allocation2 + $0xd0] sm:$0xff] %v559
          %596 = vst [vmem:[#allocation2 + $0xd8] sm:$0xff] %v561
          %597 = vst [vmem:[#allocation2 + $0xe0] sm:$0xff] %v452
          %598 = vst [vmem:[#allocation2 + $0xe8] sm:$0xff] %v454
          %599 = vst [vmem:[#allocation2 + $0xf0] sm:$0xff] %v565
          %600 = vst [vmem:[#allocation2 + $0xf8] sm:$0xff] %v567
        $region48: #{tpu_custom_call.1} parent=35 // pred_fallthru
          _
        %p601 = scmp.gt.s32.totalorder %s41, 0
        %p602 = scmp.lt.s32.totalorder %s41, %s301
        %p603 = pnand %p601, %p602
        %p604 = pneg %p603
        // Predicated region
        $region49: #{tpu_custom_call.1} parent=35 // pred_check
          _
        $region50: #{tpu_custom_call.1} parent=35 // pred_check_branch
          %606 = sbr.rel (%p603) target = $region52
        $region51: #{tpu_custom_call.1} parent=35 // pred_region
          %v607 = vld [vmem:[%s3] sm:$0xff]
          %v608 = vld [vmem:[%s3 + $0x8] sm:$0xff]
          %v609 = vld [vmem:[%s3 + $0x10] sm:$0xff]
          %v610 = vld [vmem:[%s3 + $0x18] sm:$0xff]
          %v611 = vld [vmem:[%s3 + $0x20] sm:$0xff]
          %v612 = vld [vmem:[%s3 + $0x28] sm:$0xff]
          %v613 = vld [vmem:[%s3 + $0x30] sm:$0xff]
          %v614 = vld [vmem:[%s3 + $0x38] sm:$0xff]
          %v615 = vld [vmem:[%s263] sm:$0xff]
          %v616 = vld [vmem:[%s263 + $0x8] sm:$0xff]
          %v617 = vld [vmem:[%s263 + $0x10] sm:$0xff]
          %v618 = vld [vmem:[%s263 + $0x18] sm:$0xff]
          %vm619 = vcmask 64512
          %v621 = vsel %vm619, %v607, 0
          %v624 = vsel %vm619, %v608, 0
          %v627 = vsel %vm619, %v609, 0
          %v630 = vsel %vm619, %v610, 0
          %v633 = vsel %vm619, %v611, 0
          %v636 = vsel %vm619, %v612, 0
          %v639 = vsel %vm619, %v613, 0
          %v642 = vsel %vm619, %v614, 0
          %644 = vmatprep.subr.mxu0 0.0
          %645 = vmatpush1.msra.mxu0 0.0
          %646 = vmatprep.subr.mxu0 0.0
          %647 = vmatpush1.msra.mxu0 0.0
          %648 = vmatprep.subr.mxu0 0.0
          %649 = vmatpush1.msra.mxu0 0.0
          %650 = vmatprep.subr.mxu0 0.0
          %651 = vmatpush1.msra.mxu0 0.0
          %652 = vmatprep.subr.mxu0 0.0
          %653 = vmatpush1.msra.mxu0 0.0
          %654 = vmatprep.subr.mxu0 0.0
          %655 = vmatpush1.msra.mxu0 0.0
          %656 = vmatprep.subr.mxu0 0.0
          %657 = vmatpush1.msra.mxu0 0.0
          %658 = vmatprep.subr.mxu0 0.0
          %659 = vmatpush1.msra.mxu0 0.0
          %660 = vmatprep.subr.mxu0 0.0
          %661 = vmatpush1.msra.mxu0 0.0
          %662 = vmatprep.subr.mxu0 0.0
          %663 = vmatpush1.msra.mxu0 0.0
          %664 = vmatprep.subr.mxu0 0.0
          %665 = vmatpush1.msra.mxu0 0.0
          %666 = vmatprep.subr.mxu0 0.0
          %667 = vmatpush1.msra.mxu0 0.0
          %668 = vmatprep.subr.mxu0 0.0
          %669 = vmatpush1.msra.mxu0 0.0
          %670 = vmatprep.subr.mxu0 0.0
          %671 = vmatpush1.msra.mxu0 0.0
          %672 = vmatprep.subr.mxu0 0.0
          %673 = vmatpush1.msra.mxu0 0.0
          %674 = vmatprep.subr.mxu0 %v616
          %675 = vmatpush1.msra.mxu0 %v615
          %676 = vmatprep.subr.mxu0 0.0
          %677 = vmatpush2.msra.mxu0 0.0
          %678 = vmatprep.subr.mxu0 0.0
          %679 = vmatpush2.msra.mxu0 0.0
          %680 = vmatprep.subr.mxu0 0.0
          %681 = vmatpush2.msra.mxu0 0.0
          %682 = vmatprep.subr.mxu0 0.0
          %683 = vmatpush2.msra.mxu0 0.0
          %684 = vmatprep.subr.mxu0 0.0
          %685 = vmatpush2.msra.mxu0 0.0
          %686 = vmatprep.subr.mxu0 0.0
          %687 = vmatpush2.msra.mxu0 0.0
          %688 = vmatprep.subr.mxu0 0.0
          %689 = vmatpush2.msra.mxu0 0.0
          %690 = vmatprep.subr.mxu0 0.0
          %691 = vmatpush2.msra.mxu0 0.0
          %692 = vmatprep.subr.mxu0 0.0
          %693 = vmatpush2.msra.mxu0 0.0
          %694 = vmatprep.subr.mxu0 0.0
          %695 = vmatpush2.msra.mxu0 0.0
          %696 = vmatprep.subr.mxu0 0.0
          %697 = vmatpush2.msra.mxu0 0.0
          %698 = vmatprep.subr.mxu0 0.0
          %699 = vmatpush2.msra.mxu0 0.0
          %700 = vmatprep.subr.mxu0 0.0
          %701 = vmatpush2.msra.mxu0 0.0
          %702 = vmatprep.subr.mxu0 0.0
          %703 = vmatpush2.msra.mxu0 0.0
          %704 = vmatprep.subr.mxu0 0.0
          %705 = vmatpush2.msra.mxu0 0.0
          %706 = vmatprep.subr.mxu0 0.0
          %707 = vmatpush2.msra.mxu0 0.0
          %708 = vmatprep.mubr.f32.mxu0 0.0
          %709 = vmatmul.mubr.f32.gmra.mxu0 %v621
          %v710 = vpop.f32.mrf.mxu0
          %v711 = vadd.f32 0.0, %v710
          %v712 = vpop.f32.mrf.mxu0
          %v713 = vadd.f32 0.0, %v712
          %714 = vmatprep.mubr.f32.mxu0 0.0
          %715 = vmatmul.mubr.f32.gmra.mxu0 %v624
          %v716 = vpop.f32.mrf.mxu0
          %v717 = vadd.f32 0.0, %v716
          %v718 = vpop.f32.mrf.mxu0
          %v719 = vadd.f32 0.0, %v718
          %720 = vmatprep.mubr.f32.mxu0 0.0
          %721 = vmatmul.mubr.f32.gmra.mxu0 %v627
          %v722 = vpop.f32.mrf.mxu0
          %v723 = vadd.f32 0.0, %v722
          %v724 = vpop.f32.mrf.mxu0
          %v725 = vadd.f32 0.0, %v724
          %726 = vmatprep.mubr.f32.mxu0 0.0
          %727 = vmatmul.mubr.f32.gmra.mxu0 %v630
          %v728 = vpop.f32.mrf.mxu0
          %v729 = vadd.f32 0.0, %v728
          %v730 = vpop.f32.mrf.mxu0
          %v731 = vadd.f32 0.0, %v730
          %732 = vmatprep.mubr.f32.mxu0 0.0
          %733 = vmatmul.mubr.f32.gmra.mxu0 %v633
          %v734 = vpop.f32.mrf.mxu0
          %v735 = vadd.f32 0.0, %v734
          %v736 = vpop.f32.mrf.mxu0
          %v737 = vadd.f32 0.0, %v736
          %738 = vmatprep.mubr.f32.mxu0 0.0
          %739 = vmatmul.mubr.f32.gmra.mxu0 %v636
          %v740 = vpop.f32.mrf.mxu0
          %v741 = vadd.f32 0.0, %v740
          %v742 = vpop.f32.mrf.mxu0
          %v743 = vadd.f32 0.0, %v742
          %744 = vmatprep.mubr.f32.mxu0 0.0
          %745 = vmatmul.mubr.f32.gmra.mxu0 %v639
          %v746 = vpop.f32.mrf.mxu0
          %v747 = vadd.f32 0.0, %v746
          %v748 = vpop.f32.mrf.mxu0
          %v749 = vadd.f32 0.0, %v748
          %750 = vmatprep.mubr.f32.mxu0 0.0
          %751 = vmatmul.mubr.f32.gmra.mxu0 %v642
          %v752 = vpop.f32.mrf.mxu0
          %v753 = vadd.f32 0.0, %v752
          %v754 = vpop.f32.mrf.mxu0
          %v755 = vadd.f32 0.0, %v754
          %756 = vdwg.mxu0
          %757 = vmatprep.subr.mxu0 0.0
          %758 = vmatpush1.msra.mxu0 0.0
          %759 = vmatprep.subr.mxu0 0.0
          %760 = vmatpush1.msra.mxu0 0.0
          %761 = vmatprep.subr.mxu0 0.0
          %762 = vmatpush1.msra.mxu0 0.0
          %763 = vmatprep.subr.mxu0 0.0
          %764 = vmatpush1.msra.mxu0 0.0
          %765 = vmatprep.subr.mxu0 0.0
          %766 = vmatpush1.msra.mxu0 0.0
          %767 = vmatprep.subr.mxu0 0.0
          %768 = vmatpush1.msra.mxu0 0.0
          %769 = vmatprep.subr.mxu0 0.0
          %770 = vmatpush1.msra.mxu0 0.0
          %771 = vmatprep.subr.mxu0 0.0
          %772 = vmatpush1.msra.mxu0 0.0
          %773 = vmatprep.subr.mxu0 0.0
          %774 = vmatpush1.msra.mxu0 0.0
          %775 = vmatprep.subr.mxu0 0.0
          %776 = vmatpush1.msra.mxu0 0.0
          %777 = vmatprep.subr.mxu0 0.0
          %778 = vmatpush1.msra.mxu0 0.0
          %779 = vmatprep.subr.mxu0 0.0
          %780 = vmatpush1.msra.mxu0 0.0
          %781 = vmatprep.subr.mxu0 0.0
          %782 = vmatpush1.msra.mxu0 0.0
          %783 = vmatprep.subr.mxu0 0.0
          %784 = vmatpush1.msra.mxu0 0.0
          %785 = vmatprep.subr.mxu0 0.0
          %786 = vmatpush1.msra.mxu0 0.0
          %787 = vmatprep.subr.mxu0 %v618
          %788 = vmatpush1.msra.mxu0 %v617
          %789 = vmatprep.subr.mxu0 0.0
          %790 = vmatpush2.msra.mxu0 0.0
          %791 = vmatprep.subr.mxu0 0.0
          %792 = vmatpush2.msra.mxu0 0.0
          %793 = vmatprep.subr.mxu0 0.0
          %794 = vmatpush2.msra.mxu0 0.0
          %795 = vmatprep.subr.mxu0 0.0
          %796 = vmatpush2.msra.mxu0 0.0
          %797 = vmatprep.subr.mxu0 0.0
          %798 = vmatpush2.msra.mxu0 0.0
          %799 = vmatprep.subr.mxu0 0.0
          %800 = vmatpush2.msra.mxu0 0.0
          %801 = vmatprep.subr.mxu0 0.0
          %802 = vmatpush2.msra.mxu0 0.0
          %803 = vmatprep.subr.mxu0 0.0
          %804 = vmatpush2.msra.mxu0 0.0
          %805 = vmatprep.subr.mxu0 0.0
          %806 = vmatpush2.msra.mxu0 0.0
          %807 = vmatprep.subr.mxu0 0.0
          %808 = vmatpush2.msra.mxu0 0.0
          %809 = vmatprep.subr.mxu0 0.0
          %810 = vmatpush2.msra.mxu0 0.0
          %811 = vmatprep.subr.mxu0 0.0
          %812 = vmatpush2.msra.mxu0 0.0
          %813 = vmatprep.subr.mxu0 0.0
          %814 = vmatpush2.msra.mxu0 0.0
          %815 = vmatprep.subr.mxu0 0.0
          %816 = vmatpush2.msra.mxu0 0.0
          %817 = vmatprep.subr.mxu0 0.0
          %818 = vmatpush2.msra.mxu0 0.0
          %819 = vmatprep.subr.mxu0 0.0
          %820 = vmatpush2.msra.mxu0 0.0
          %821 = vmatprep.mubr.f32.mxu0 0.0
          %822 = vmatmul.mubr.f32.gmra.mxu0 %v621
          %v823 = vpop.f32.mrf.mxu0
          %v824 = vadd.f32 0.0, %v823
          %v825 = vpop.f32.mrf.mxu0
          %v826 = vadd.f32 0.0, %v825
          %827 = vmatprep.mubr.f32.mxu0 0.0
          %828 = vmatmul.mubr.f32.gmra.mxu0 %v624
          %v829 = vpop.f32.mrf.mxu0
          %v830 = vadd.f32 0.0, %v829
          %v831 = vpop.f32.mrf.mxu0
          %v832 = vadd.f32 0.0, %v831
          %833 = vmatprep.mubr.f32.mxu0 0.0
          %834 = vmatmul.mubr.f32.gmra.mxu0 %v627
          %v835 = vpop.f32.mrf.mxu0
          %v836 = vadd.f32 0.0, %v835
          %v837 = vpop.f32.mrf.mxu0
          %v838 = vadd.f32 0.0, %v837
          %839 = vmatprep.mubr.f32.mxu0 0.0
          %840 = vmatmul.mubr.f32.gmra.mxu0 %v630
          %v841 = vpop.f32.mrf.mxu0
          %v842 = vadd.f32 0.0, %v841
          %v843 = vpop.f32.mrf.mxu0
          %v844 = vadd.f32 0.0, %v843
          %845 = vmatprep.mubr.f32.mxu0 0.0
          %846 = vmatmul.mubr.f32.gmra.mxu0 %v633
          %v847 = vpop.f32.mrf.mxu0
          %v848 = vadd.f32 0.0, %v847
          %v849 = vpop.f32.mrf.mxu0
          %v850 = vadd.f32 0.0, %v849
          %851 = vmatprep.mubr.f32.mxu0 0.0
          %852 = vmatmul.mubr.f32.gmra.mxu0 %v636
          %v853 = vpop.f32.mrf.mxu0
          %v854 = vadd.f32 0.0, %v853
          %v855 = vpop.f32.mrf.mxu0
          %v856 = vadd.f32 0.0, %v855
          %857 = vmatprep.mubr.f32.mxu0 0.0
          %858 = vmatmul.mubr.f32.gmra.mxu0 %v639
          %v859 = vpop.f32.mrf.mxu0
          %v860 = vadd.f32 0.0, %v859
          %v861 = vpop.f32.mrf.mxu0
          %v862 = vadd.f32 0.0, %v861
          %863 = vmatprep.mubr.f32.mxu0 0.0
          %864 = vmatmul.mubr.f32.gmra.mxu0 %v642
          %v865 = vpop.f32.mrf.mxu0
          %v866 = vadd.f32 0.0, %v865
          %v867 = vpop.f32.mrf.mxu0
          %v868 = vadd.f32 0.0, %v867
          %869 = vdwg.mxu0
          %v870 = vld [vmem:[#allocation2] sm:$0xff]
          %v871 = vld [vmem:[#allocation2 + $0x8] sm:$0xff]
          %v872 = vld [vmem:[#allocation2 + $0x10] sm:$0xff]
          %v873 = vld [vmem:[#allocation2 + $0x18] sm:$0xff]
          %v874 = vld [vmem:[#allocation2 + $0x20] sm:$0xff]
          %v875 = vld [vmem:[#allocation2 + $0x28] sm:$0xff]
          %v876 = vld [vmem:[#allocation2 + $0x30] sm:$0xff]
          %v877 = vld [vmem:[#allocation2 + $0x38] sm:$0xff]
          %v878 = vld [vmem:[#allocation2 + $0x40] sm:$0xff]
          %v879 = vld [vmem:[#allocation2 + $0x48] sm:$0xff]
          %v880 = vld [vmem:[#allocation2 + $0x50] sm:$0xff]
          %v881 = vld [vmem:[#allocation2 + $0x58] sm:$0xff]
          %v882 = vld [vmem:[#allocation2 + $0x60] sm:$0xff]
          %v883 = vld [vmem:[#allocation2 + $0x68] sm:$0xff]
          %v884 = vld [vmem:[#allocation2 + $0x70] sm:$0xff]
          %v885 = vld [vmem:[#allocation2 + $0x78] sm:$0xff]
          %v886 = vld [vmem:[#allocation2 + $0x80] sm:$0xff]
          %v887 = vld [vmem:[#allocation2 + $0x88] sm:$0xff]
          %v888 = vld [vmem:[#allocation2 + $0x90] sm:$0xff]
          %v889 = vld [vmem:[#allocation2 + $0x98] sm:$0xff]
          %v890 = vld [vmem:[#allocation2 + $0xa0] sm:$0xff]
          %v891 = vld [vmem:[#allocation2 + $0xa8] sm:$0xff]
          %v892 = vld [vmem:[#allocation2 + $0xb0] sm:$0xff]
          %v893 = vld [vmem:[#allocation2 + $0xb8] sm:$0xff]
          %v894 = vld [vmem:[#allocation2 + $0xc0] sm:$0xff]
          %v895 = vld [vmem:[#allocation2 + $0xc8] sm:$0xff]
          %v896 = vld [vmem:[#allocation2 + $0xd0] sm:$0xff]
          %v897 = vld [vmem:[#allocation2 + $0xd8] sm:$0xff]
          %v898 = vld [vmem:[#allocation2 + $0xe0] sm:$0xff]
          %v899 = vld [vmem:[#allocation2 + $0xe8] sm:$0xff]
          %v900 = vld [vmem:[#allocation2 + $0xf0] sm:$0xff]
          %v901 = vld [vmem:[#allocation2 + $0xf8] sm:$0xff]
          %v902 = vmax.f32 %v870, %v711
          %v903 = vmax.f32 %v871, %v713
          %v904 = vmax.f32 %v872, %v824
          %v905 = vmax.f32 %v873, %v826
          %v906 = vmax.f32 %v874, %v717
          %v907 = vmax.f32 %v875, %v719
          %v908 = vmax.f32 %v876, %v830
          %v909 = vmax.f32 %v877, %v832
          %v910 = vmax.f32 %v878, %v723
          %v911 = vmax.f32 %v879, %v725
          %v912 = vmax.f32 %v880, %v836
          %v913 = vmax.f32 %v881, %v838
          %v914 = vmax.f32 %v882, %v729
          %v915 = vmax.f32 %v883, %v731
          %v916 = vmax.f32 %v884, %v842
          %v917 = vmax.f32 %v885, %v844
          %v918 = vmax.f32 %v886, %v735
          %v919 = vmax.f32 %v887, %v737
          %v920 = vmax.f32 %v888, %v848
          %v921 = vmax.f32 %v889, %v850
          %v922 = vmax.f32 %v890, %v741
          %v923 = vmax.f32 %v891, %v743
          %v924 = vmax.f32 %v892, %v854
          %v925 = vmax.f32 %v893, %v856
          %v926 = vmax.f32 %v894, %v747
          %v927 = vmax.f32 %v895, %v749
          %v928 = vmax.f32 %v896, %v860
          %v929 = vmax.f32 %v897, %v862
          %v930 = vmax.f32 %v898, %v753
          %v931 = vmax.f32 %v899, %v755
          %v932 = vmax.f32 %v900, %v866
          %v933 = vmax.f32 %v901, %v868
          %934 = vst [vmem:[#allocation2] sm:$0xff] %v902
          %935 = vst [vmem:[#allocation2 + $0x8] sm:$0xff] %v903
          %936 = vst [vmem:[#allocation2 + $0x10] sm:$0xff] %v904
          %937 = vst [vmem:[#allocation2 + $0x18] sm:$0xff] %v905
          %938 = vst [vmem:[#allocation2 + $0x20] sm:$0xff] %v906
          %939 = vst [vmem:[#allocation2 + $0x28] sm:$0xff] %v907
          %940 = vst [vmem:[#allocation2 + $0x30] sm:$0xff] %v908
          %941 = vst [vmem:[#allocation2 + $0x38] sm:$0xff] %v909
          %942 = vst [vmem:[#allocation2 + $0x40] sm:$0xff] %v910
          %943 = vst [vmem:[#allocation2 + $0x48] sm:$0xff] %v911
          %944 = vst [vmem:[#allocation2 + $0x50] sm:$0xff] %v912
          %945 = vst [vmem:[#allocation2 + $0x58] sm:$0xff] %v913
          %946 = vst [vmem:[#allocation2 + $0x60] sm:$0xff] %v914
          %947 = vst [vmem:[#allocation2 + $0x68] sm:$0xff] %v915
          %948 = vst [vmem:[#allocation2 + $0x70] sm:$0xff] %v916
          %949 = vst [vmem:[#allocation2 + $0x78] sm:$0xff] %v917
          %950 = vst [vmem:[#allocation2 + $0x80] sm:$0xff] %v918
          %951 = vst [vmem:[#allocation2 + $0x88] sm:$0xff] %v919
          %952 = vst [vmem:[#allocation2 + $0x90] sm:$0xff] %v920
          %953 = vst [vmem:[#allocation2 + $0x98] sm:$0xff] %v921
          %954 = vst [vmem:[#allocation2 + $0xa0] sm:$0xff] %v922
          %955 = vst [vmem:[#allocation2 + $0xa8] sm:$0xff] %v923
          %956 = vst [vmem:[#allocation2 + $0xb0] sm:$0xff] %v924
          %957 = vst [vmem:[#allocation2 + $0xb8] sm:$0xff] %v925
          %958 = vst [vmem:[#allocation2 + $0xc0] sm:$0xff] %v926
          %959 = vst [vmem:[#allocation2 + $0xc8] sm:$0xff] %v927
          %960 = vst [vmem:[#allocation2 + $0xd0] sm:$0xff] %v928
          %961 = vst [vmem:[#allocation2 + $0xd8] sm:$0xff] %v929
          %962 = vst [vmem:[#allocation2 + $0xe0] sm:$0xff] %v930
          %963 = vst [vmem:[#allocation2 + $0xe8] sm:$0xff] %v931
          %964 = vst [vmem:[#allocation2 + $0xf0] sm:$0xff] %v932
          %965 = vst [vmem:[#allocation2 + $0xf8] sm:$0xff] %v933
        $region52: #{tpu_custom_call.1} parent=35 // pred_fallthru
          _
        %p966 = scmp.eq.s32.totalorder %s41, 1
        // Predicated region
        $region53: #{tpu_custom_call.1} parent=35 // pred_check
          %p967 = pneg %p966
        $region54: #{tpu_custom_call.1} parent=35 // pred_check_branch
          %969 = sbr.rel (%p967) target = $region56
        $region55: #{tpu_custom_call.1} parent=35 // pred_region
          %v970 = vld [vmem:[%s4] sm:$0xff]
          %v971 = vld [vmem:[%s4 + $0x8] sm:$0xff]
          %v972 = vld [vmem:[%s4 + $0x10] sm:$0xff]
          %v973 = vld [vmem:[#allocation2] sm:$0xff]
          %v974 = vld [vmem:[#allocation2 + $0x8] sm:$0xff]
          %v975 = vld [vmem:[#allocation2 + $0x10] sm:$0xff]
          %v976 = vld [vmem:[#allocation2 + $0x18] sm:$0xff]
          %v977 = vld [vmem:[#allocation2 + $0x20] sm:$0xff]
          %v978 = vld [vmem:[#allocation2 + $0x28] sm:$0xff]
          %v979 = vld [vmem:[#allocation2 + $0x30] sm:$0xff]
          %v980 = vld [vmem:[#allocation2 + $0x38] sm:$0xff]
          %v981 = vld [vmem:[#allocation2 + $0x40] sm:$0xff]
          %v982 = vld [vmem:[#allocation2 + $0x48] sm:$0xff]
          %v983 = vld [vmem:[#allocation2 + $0x50] sm:$0xff]
          %v984 = vld [vmem:[#allocation2 + $0x58] sm:$0xff]
          %v985 = vld [vmem:[#allocation2 + $0x60] sm:$0xff]
          %v986 = vld [vmem:[#allocation2 + $0x68] sm:$0xff]
          %v987 = vld [vmem:[#allocation2 + $0x70] sm:$0xff]
          %v988 = vld [vmem:[#allocation2 + $0x78] sm:$0xff]
          %v989 = vld [vmem:[#allocation2 + $0x80] sm:$0xff]
          %v990 = vld [vmem:[#allocation2 + $0x88] sm:$0xff]
          %v991 = vld [vmem:[#allocation2 + $0x90] sm:$0xff]
          %v992 = vld [vmem:[#allocation2 + $0x98] sm:$0xff]
          %v993 = vld [vmem:[#allocation2 + $0xa0] sm:$0xff]
          %v994 = vld [vmem:[#allocation2 + $0xa8] sm:$0xff]
          %v995 = vld [vmem:[#allocation2 + $0xb0] sm:$0xff]
          %v996 = vld [vmem:[#allocation2 + $0xb8] sm:$0xff]
          %v997 = vld [vmem:[#allocation2 + $0xc0] sm:$0xff]
          %v998 = vld [vmem:[#allocation2 + $0xc8] sm:$0xff]
          %v999 = vld [vmem:[#allocation2 + $0xd0] sm:$0xff]
          %v1000 = vld [vmem:[#allocation2 + $0xd8] sm:$0xff]
          %v1001 = vld [vmem:[#allocation2 + $0xe0] sm:$0xff]
          %v1002 = vld [vmem:[#allocation2 + $0xe8] sm:$0xff]
          %v1003 = vld [vmem:[#allocation2 + $0xf0] sm:$0xff]
          %v1004 = vld [vmem:[#allocation2 + $0xf8] sm:$0xff]
          %v1005 = vld [vmem:[#allocation9] sm:$0xff]
          %v1006 = vld [vmem:[#allocation9 + $0x8] sm:$0xff]
          %v1007 = vld [vmem:[#allocation9 + $0x10] sm:$0xff]
          %v1008 = vld [vmem:[#allocation9 + $0x18] sm:$0xff]
          %v1009 = vld [vmem:[#allocation9 + $0x20] sm:$0xff]
          %v1010 = vld [vmem:[#allocation9 + $0x28] sm:$0xff]
          %v1011 = vld [vmem:[#allocation9 + $0x30] sm:$0xff]
          %v1012 = vld [vmem:[#allocation9 + $0x38] sm:$0xff]
          %v1013 = vld [vmem:[#allocation9 + $0x40] sm:$0xff]
          %v1014 = vld [vmem:[#allocation9 + $0x48] sm:$0xff]
          %v1015 = vld [vmem:[#allocation9 + $0x50] sm:$0xff]
          %v1016 = vld [vmem:[#allocation9 + $0x58] sm:$0xff]
          %vm1017 = vcmask 523264
          %v1019 = vsel %vm1017, %v970, 0
          %v1022 = vsel %vm1017, %v971, 0
          %v1025 = vsel %vm1017, %v972, 0
          %1027 = vmatprep.subr.mxu0 0.0
          %1028 = vmatpush1.msra.mxu0 0.0
          %1029 = vmatprep.subr.mxu0 0.0
          %1030 = vmatpush1.msra.mxu0 0.0
          %1031 = vmatprep.subr.mxu0 0.0
          %1032 = vmatpush1.msra.mxu0 0.0
          %1033 = vmatprep.subr.mxu0 0.0
          %1034 = vmatpush1.msra.mxu0 0.0
          %1035 = vmatprep.subr.mxu0 0.0
          %1036 = vmatpush1.msra.mxu0 0.0
          %1037 = vmatprep.subr.mxu0 0.0
          %1038 = vmatpush1.msra.mxu0 0.0
          %1039 = vmatprep.subr.mxu0 0.0
          %1040 = vmatpush1.msra.mxu0 0.0
          %1041 = vmatprep.subr.mxu0 0.0
          %1042 = vmatpush1.msra.mxu0 0.0
          %1043 = vmatprep.subr.mxu0 %v1002
          %1044 = vmatpush1.msra.mxu0 %v1001
          %1045 = vmatprep.subr.mxu0 %v998
          %1046 = vmatpush1.msra.mxu0 %v997
          %1047 = vmatprep.subr.mxu0 %v994
          %1048 = vmatpush1.msra.mxu0 %v993
          %1049 = vmatprep.subr.mxu0 %v990
          %1050 = vmatpush1.msra.mxu0 %v989
          %1051 = vmatprep.subr.mxu0 %v986
          %1052 = vmatpush1.msra.mxu0 %v985
          %1053 = vmatprep.subr.mxu0 %v982
          %1054 = vmatpush1.msra.mxu0 %v981
          %1055 = vmatprep.subr.mxu0 %v978
          %1056 = vmatpush1.msra.mxu0 %v977
          %1057 = vmatprep.subr.mxu0 %v974
          %1058 = vmatpush1.msra.mxu0 %v973
          %1059 = vmatprep.subr.mxu0 0.0
          %1060 = vmatpush2.msra.mxu0 0.0
          %1061 = vmatprep.subr.mxu0 0.0
          %1062 = vmatpush2.msra.mxu0 0.0
          %1063 = vmatprep.subr.mxu0 0.0
          %1064 = vmatpush2.msra.mxu0 0.0
          %1065 = vmatprep.subr.mxu0 0.0
          %1066 = vmatpush2.msra.mxu0 0.0
          %1067 = vmatprep.subr.mxu0 0.0
          %1068 = vmatpush2.msra.mxu0 0.0
          %1069 = vmatprep.subr.mxu0 0.0
          %1070 = vmatpush2.msra.mxu0 0.0
          %1071 = vmatprep.subr.mxu0 0.0
          %1072 = vmatpush2.msra.mxu0 0.0
          %1073 = vmatprep.subr.mxu0 0.0
          %1074 = vmatpush2.msra.mxu0 0.0
          %1075 = vmatprep.subr.mxu0 0.0
          %1076 = vmatpush2.msra.mxu0 0.0
          %1077 = vmatprep.subr.mxu0 0.0
          %1078 = vmatpush2.msra.mxu0 0.0
          %1079 = vmatprep.subr.mxu0 0.0
          %1080 = vmatpush2.msra.mxu0 0.0
          %1081 = vmatprep.subr.mxu0 0.0
          %1082 = vmatpush2.msra.mxu0 0.0
          %1083 = vmatprep.subr.mxu0 0.0
          %1084 = vmatpush2.msra.mxu0 0.0
          %1085 = vmatprep.subr.mxu0 0.0
          %1086 = vmatpush2.msra.mxu0 0.0
          %1087 = vmatprep.subr.mxu0 0.0
          %1088 = vmatpush2.msra.mxu0 0.0
          %1089 = vmatprep.subr.mxu0 0.0
          %1090 = vmatpush2.msra.mxu0 0.0
          %1091 = vmatprep.mubr.f32.mxu0 0.0
          %1092 = vmatmul.mubr.f32.gmra.mxu0 %v1019
          %v1093 = vpop.f32.mrf.mxu0
          %v1094 = vadd.f32 %v1005, %v1093
          %v1095 = vpop.f32.mrf.mxu0
          %v1096 = vadd.f32 %v1006, %v1095
          %1097 = vmatprep.mubr.f32.mxu0 0.0
          %1098 = vmatmul.mubr.f32.gmra.mxu0 %v1022
          %v1099 = vpop.f32.mrf.mxu0
          %v1100 = vadd.f32 %v1009, %v1099
          %v1101 = vpop.f32.mrf.mxu0
          %v1102 = vadd.f32 %v1010, %v1101
          %1103 = vmatprep.mubr.f32.mxu0 0.0
          %1104 = vmatmul.mubr.f32.gmra.mxu0 %v1025
          %v1105 = vpop.f32.mrf.mxu0
          %v1106 = vadd.f32 %v1013, %v1105
          %v1107 = vpop.f32.mrf.mxu0
          %v1108 = vadd.f32 %v1014, %v1107
          %1109 = vdwg.mxu0
          %1110 = vmatprep.subr.mxu0 0.0
          %1111 = vmatpush1.msra.mxu0 0.0
          %1112 = vmatprep.subr.mxu0 0.0
          %1113 = vmatpush1.msra.mxu0 0.0
          %1114 = vmatprep.subr.mxu0 0.0
          %1115 = vmatpush1.msra.mxu0 0.0
          %1116 = vmatprep.subr.mxu0 0.0
          %1117 = vmatpush1.msra.mxu0 0.0
          %1118 = vmatprep.subr.mxu0 0.0
          %1119 = vmatpush1.msra.mxu0 0.0
          %1120 = vmatprep.subr.mxu0 0.0
          %1121 = vmatpush1.msra.mxu0 0.0
          %1122 = vmatprep.subr.mxu0 0.0
          %1123 = vmatpush1.msra.mxu0 0.0
          %1124 = vmatprep.subr.mxu0 0.0
          %1125 = vmatpush1.msra.mxu0 0.0
          %1126 = vmatprep.subr.mxu0 %v1004
          %1127 = vmatpush1.msra.mxu0 %v1003
          %1128 = vmatprep.subr.mxu0 %v1000
          %1129 = vmatpush1.msra.mxu0 %v999
          %1130 = vmatprep.subr.mxu0 %v996
          %1131 = vmatpush1.msra.mxu0 %v995
          %1132 = vmatprep.subr.mxu0 %v992
          %1133 = vmatpush1.msra.mxu0 %v991
          %1134 = vmatprep.subr.mxu0 %v988
          %1135 = vmatpush1.msra.mxu0 %v987
          %1136 = vmatprep.subr.mxu0 %v984
          %1137 = vmatpush1.msra.mxu0 %v983
          %1138 = vmatprep.subr.mxu0 %v980
          %1139 = vmatpush1.msra.mxu0 %v979
          %1140 = vmatprep.subr.mxu0 %v976
          %1141 = vmatpush1.msra.mxu0 %v975
          %1142 = vmatprep.subr.mxu0 0.0
          %1143 = vmatpush2.msra.mxu0 0.0
          %1144 = vmatprep.subr.mxu0 0.0
          %1145 = vmatpush2.msra.mxu0 0.0
          %1146 = vmatprep.subr.mxu0 0.0
          %1147 = vmatpush2.msra.mxu0 0.0
          %1148 = vmatprep.subr.mxu0 0.0
          %1149 = vmatpush2.msra.mxu0 0.0
          %1150 = vmatprep.subr.mxu0 0.0
          %1151 = vmatpush2.msra.mxu0 0.0
          %1152 = vmatprep.subr.mxu0 0.0
          %1153 = vmatpush2.msra.mxu0 0.0
          %1154 = vmatprep.subr.mxu0 0.0
          %1155 = vmatpush2.msra.mxu0 0.0
          %1156 = vmatprep.subr.mxu0 0.0
          %1157 = vmatpush2.msra.mxu0 0.0
          %1158 = vmatprep.subr.mxu0 0.0
          %1159 = vmatpush2.msra.mxu0 0.0
          %1160 = vmatprep.subr.mxu0 0.0
          %1161 = vmatpush2.msra.mxu0 0.0
          %1162 = vmatprep.subr.mxu0 0.0
          %1163 = vmatpush2.msra.mxu0 0.0
          %1164 = vmatprep.subr.mxu0 0.0
          %1165 = vmatpush2.msra.mxu0 0.0
          %1166 = vmatprep.subr.mxu0 0.0
          %1167 = vmatpush2.msra.mxu0 0.0
          %1168 = vmatprep.subr.mxu0 0.0
          %1169 = vmatpush2.msra.mxu0 0.0
          %1170 = vmatprep.subr.mxu0 0.0
          %1171 = vmatpush2.msra.mxu0 0.0
          %1172 = vmatprep.subr.mxu0 0.0
          %1173 = vmatpush2.msra.mxu0 0.0
          %1174 = vmatprep.mubr.f32.mxu0 0.0
          %1175 = vmatmul.mubr.f32.gmra.mxu0 %v1019
          %v1176 = vpop.f32.mrf.mxu0
          %v1177 = vadd.f32 %v1007, %v1176
          %v1178 = vpop.f32.mrf.mxu0
          %v1179 = vadd.f32 %v1008, %v1178
          %1180 = vmatprep.mubr.f32.mxu0 0.0
          %1181 = vmatmul.mubr.f32.gmra.mxu0 %v1022
          %v1182 = vpop.f32.mrf.mxu0
          %v1183 = vadd.f32 %v1011, %v1182
          %v1184 = vpop.f32.mrf.mxu0
          %v1185 = vadd.f32 %v1012, %v1184
          %1186 = vmatprep.mubr.f32.mxu0 0.0
          %1187 = vmatmul.mubr.f32.gmra.mxu0 %v1025
          %v1188 = vpop.f32.mrf.mxu0
          %v1189 = vadd.f32 %v1015, %v1188
          %v1190 = vpop.f32.mrf.mxu0
          %v1191 = vadd.f32 %v1016, %v1190
          %1192 = vdwg.mxu0
          %1193 = vst [vmem:[%s291] sm:$0xff] %v1094
          %1194 = vst [vmem:[%s291 + $0x8] sm:$0xff] %v1096
          %1195 = vst [vmem:[%s291 + $0x10] sm:$0xff] %v1177
          %1196 = vst [vmem:[%s291 + $0x18] sm:$0xff] %v1179
          %1197 = vst [vmem:[%s291 + $0x20] sm:$0xff] %v1100
          %1198 = vst [vmem:[%s291 + $0x28] sm:$0xff] %v1102
          %1199 = vst [vmem:[%s291 + $0x30] sm:$0xff] %v1183
          %1200 = vst [vmem:[%s291 + $0x38] sm:$0xff] %v1185
          %1201 = vst [vmem:[%s291 + $0x40] sm:$0xff] %v1106
          %1202 = vst [vmem:[%s291 + $0x48] sm:$0xff] %v1108
          %1203 = vst [vmem:[%s291 + $0x50] sm:$0xff] %v1189
          %1204 = vst [vmem:[%s291 + $0x58] sm:$0xff] %v1191
        $region56: #{tpu_custom_call.1} parent=35 // pred_fallthru
          _
        %s1205 = sand.u32 %s171, 1
        %s1206 = scalar_lea.sflag [#allocation8], %s1205
        %s1207 = sand.u32 %s171, 1
        %s1208 = smul.addr %s1207, 96
        %s1209 = scalar_lea.vmem [#allocation11], %s1208
        // Predicated region
        $region57: #{tpu_custom_call.1} parent=35 // pred_check
          %p1210 = pneg %p181
        $region58: #{tpu_custom_call.1} parent=35 // pred_check_branch
          %1212 = sbr.rel (%p1210) target = $region60
        $region59: #{tpu_custom_call.1} parent=35 // pred_region
          %s1213 = smul.u32 4, %s40
          %s1215 = ssub.s32 1536, 1536
          %1216 = vsyncadd %s1206, %s1215
          %s1217 = smul.addr %s39, 12
          %s1218 = sadd.s32 %s1213, %s1217
          %s1219 = smul.addr %s1218, 128
          %s1220 = scalar_lea.hbm %s6, %s1219
          %s1221 = sshll.u32 %s1209, 4
          %s1222 = int_to_ptr.vmem [resolvable:$true] %s1221
          %1227 = dma.vmem_to_hbm [thread:$0]  %s1222, 1536, %s1220, %s1206, 512, 512, 32
        $region60: #{tpu_custom_call.1} parent=35 // pred_fallthru
          _
      $region36: #{tpu_custom_call.1} parent=5 // pred_fallthru
        _
      %p1228 = scmp.le.s32.totalorder 2, %s29
      // Predicated region
      $region61: #{tpu_custom_call.1} parent=5 // pred_check
        %p1229 = pneg %p1228
      $region62: #{tpu_custom_call.1} parent=5 // pred_check_branch
        %1231 = sbr.rel (%p1229) target = $region64
      $region63: #{tpu_custom_call.1} parent=5 // pred_region
        %s1232 = ssub.s32 %s29, 2
        // Predicated region
        $region65: #{tpu_custom_call.1} parent=63 // pred_check
          %p1233 = pneg %p187
        $region66: #{tpu_custom_call.1} parent=63 // pred_check_branch
          %1235 = sbr.rel (%p1233) target = $region68
        $region67: #{tpu_custom_call.1} parent=63 // pred_region
          %s1236 = sand.u32 %s172, 1
          %s1237 = scalar_lea.sflag [#allocation8], %s1236
          %s1238 = sand.u32 %s172, 1
          %s1239 = smul.addr %s1238, 96
          %s1240 = scalar_lea.vmem [#allocation11], %s1239
          %1241 = dma.done %s1237, 1536
        $region68: #{tpu_custom_call.1} parent=63 // pred_fallthru
          _
      $region64: #{tpu_custom_call.1} parent=5 // pred_fallthru
        _
    $region6: #{tpu_custom_call.1} parent=1 // loop_footer
      %s33 = sadd.s32 1, %s29
    $region7: #{tpu_custom_call.1} parent=1 // loop_footer_branch
      %28 = sbr.rel target = $region3
    $region8: #{tpu_custom_call.1} parent=1 // loop_exit
      _
    %1242 = vsyncpa [#allocation7], 1
    %s1243 = scalar_lea.sflag [#allocation7], 1
    %1244 = vsyncpa %s1243, 1
    %1245 = vsyncpa [#allocation10], 1
    %1246 = vsyncpa [#allocation8], 1
    %s1247 = scalar_lea.sflag [#allocation8], 1
    %1248 = vsyncpa %s1247, 1

</llo_original>
